<compile_context>
chip_gen: v5e
topology: v5e:2x2
jax: 0.10.0
libtpu: 0.0.40
codegen_flags: <defaults>
</compile_context>

<pallas_src>
import functools

import jax
import jax.numpy as jnp
from jax.experimental import pallas as pl
from jax.experimental.pallas import tpu as pltpu


# ----------------------------------------------------------------------------
# Chip-aware configuration
# ----------------------------------------------------------------------------
@functools.lru_cache(maxsize=1)
def _chip_config():
    """VMEM limit / tiling policy per TPU generation (safe fallback = v7x)."""
    mib = 1024 * 1024
    vmem_cap = None
    kind = ""
    try:
        vmem_cap = getattr(pltpu.get_tpu_info(), "vmem_capacity_bytes", None)
    except Exception:
        vmem_cap = None
    try:
        kind = jax.devices()[0].device_kind.lower()
    except Exception:
        kind = ""
    # v7x has 64 MiB VMEM per TensorCore and 2 TCs; stay conservative if unknown.
    small = (vmem_cap is None) or (vmem_cap <= 96 * mib) or ("7" in kind)
    limit = 48 * mib if small else 98 * mib
    if vmem_cap is not None:
        limit = min(limit, (vmem_cap * 3) // 4)
    budget = int(limit * 0.8)
    return {"vmem_limit": int(limit), "budget": budget, "force_two_steps": small}


def _mosaic_params(cfg):
    return pltpu.CompilerParams(
        dimension_semantics=("parallel",),
        vmem_limit_bytes=cfg["vmem_limit"],
    )


# ----------------------------------------------------------------------------
# Pallas kernels
# ----------------------------------------------------------------------------
def _gemm_bias_lrelu_kernel(w_ref, p_ref, b_ref, o_ref):
    """(C_out, K) @ (K, TM) + bias, fused LeakyReLU(0.2). bf16 in, f32 acc/epilogue."""
    acc = jnp.dot(w_ref[...], p_ref[...], preferred_element_type=jnp.float32)
    acc = acc + b_ref[...]                         # (C_out, 1) lane-broadcast
    o_ref[...] = jnp.where(acc >= 0.0, acc, 0.2 * acc).astype(o_ref.dtype)


def _gemm_stats_kernel(w_ref, p_ref, o_ref, stats_ref):
    """BN-block conv GEMM tile (no bias -- it cancels under BatchNorm).

    o_ref: (C_out, TM) bf16 conv output tile (cast from the f32 accumulator).
    stats_ref: (1, C_out, 128) f32 per-tile partials; lane 0 = sum, lane 1 = sum sq
    (computed from the f32 accumulator before the bf16 cast).
    """
    acc = jnp.dot(w_ref[...], p_ref[...], preferred_element_type=jnp.float32)
    o_ref[...] = acc.astype(o_ref.dtype)
    s1 = jnp.sum(acc, axis=1, keepdims=True)            # (C_out, 1)
    s2 = jnp.sum(acc * acc, axis=1, keepdims=True)       # (C_out, 1)
    lane = jax.lax.broadcasted_iota(jnp.int32, stats_ref.shape[1:], 1)
    stats_ref[0] = (jnp.where(lane == 0, s1, 0.0)
                    + jnp.where(lane == 1, s2, 0.0))


# ----------------------------------------------------------------------------
# Plain-JAX glue
# ----------------------------------------------------------------------------
def _round_up(x, mult):
    return ((x + mult - 1) // mult) * mult


def _im2col(a, k, stride, pad):
    """Channel-major im2col. a: (C, N, H, W) -> (K, M) with K = C*k*k in
    (c, kh, kw) order (matches PyTorch weight.reshape(C_out, C_in*k*k)),
    M = N*Ho*Wo. Zero padding is applied here (post-activation), matching
    nn.Conv2d padding semantics."""
    c, n, h, w = a.shape
    ap = jnp.pad(a, ((0, 0), (0, 0), (pad, pad), (pad, pad)))
    ho = (h + 2 * pad - k) // stride + 1
    wo = (w + 2 * pad - k) // stride + 1
    cols = [ap[:, :, i:i + stride * ho:stride, j:j + stride * wo:stride]
            for i in range(k) for j in range(k)]        # each (C, N, Ho, Wo)
    patches = jnp.stack(cols, axis=1)                    # (C, k*k, N, Ho, Wo)
    return patches.reshape(c * k * k, n * ho * wo), ho, wo


_TILE_CANDIDATES = (65536, 32768, 16384, 8192, 4096, 2048, 1024, 512, 256, 128)


def _choose_tiling(m, kk, c_out, cfg):
    """Pick the M-tile (multiple of 128) and the padded M it must divide."""
    m128 = _round_up(m, 128)
    max_tm = m128
    if cfg["force_two_steps"] and m128 >= 256:
        # Ensure gm >= 2 so the "parallel" axis can use both v7x TensorCores.
        max_tm = max(128, ((m128 // 2) // 128) * 128)

    def fits(tm):
        vmem = (2 * kk * tm * 2          # patch tile, bf16, double-buffered
                + 2 * c_out * kk * 2     # resident weight, bf16
                + 2 * c_out * tm * 2     # bf16 output tile, double-buffered
                + 2 * c_out * 128 * 4    # stats tile
                + 256 * 1024)            # bias + compiler scratch headroom
        return vmem <= cfg["budget"]

    # Prefer a tile that divides the 128-aligned M (no padding waste) ...
    for tm in _TILE_CANDIDATES:
        if tm <= max_tm and m128 % tm == 0 and fits(tm):
            return tm, _round_up(m, tm)
    # ... otherwise the largest tile that fits; M is padded up to a multiple.
    for tm in _TILE_CANDIDATES:
        if tm <= max_tm and fits(tm):
            return tm, _round_up(m, tm)
    return 128, m128


def _conv_gemm_inputs(a, w, k, stride, pad):
    """Shared im2col + tiling + padding prep for the gridded conv GEMMs."""
    c_out = w.shape[0]
    n = a.shape[1]
    patches, ho, wo = _im2col(a, k, stride, pad)          # (K, M) bf16
    kk, m = patches.shape
    cfg = _chip_config()
    tm, m_pad = _choose_tiling(m, kk, c_out, cfg)
    if m_pad != m:
        patches = jnp.pad(patches, ((0, 0), (0, m_pad - m)))
    wmat = w.reshape(c_out, kk).astype(jnp.bfloat16)
    meta = {"c_out": c_out, "kk": kk, "m": m, "m_pad": m_pad, "tm": tm,
            "gm": m_pad // tm, "n": n, "ho": ho, "wo": wo, "cfg": cfg}
    return patches, wmat, meta


def _conv_lrelu(a, w, b):
    """Block 1: Conv(k4,s2,p1) + bias + LeakyReLU(0.2), fused in one gridded GEMM."""
    patches, wmat, meta = _conv_gemm_inputs(a, w, 4, 2, 1)
    c_out, kk, tm, gm, m_pad = (meta["c_out"], meta["kk"], meta["tm"],
                                meta["gm"], meta["m_pad"])
    bcol = b.reshape(c_out, 1).astype(jnp.float32)

    out = pl.pallas_call(
        _gemm_bias_lrelu_kernel,
        grid=(gm,),
        in_specs=[pl.BlockSpec((c_out, kk), lambda i: (0, 0)),
                  pl.BlockSpec((kk, tm), lambda i: (0, i)),
                  pl.BlockSpec((c_out, 1), lambda i: (0, 0))],
        out_specs=pl.BlockSpec((c_out, tm), lambda i: (0, i)),
        out_shape=jax.ShapeDtypeStruct((c_out, m_pad), jnp.bfloat16),
        compiler_params=_mosaic_params(meta["cfg"]),
        cost_estimate=pl.CostEstimate(
            flops=2 * m_pad * kk * c_out, transcendentals=0,
            bytes_accessed=kk * m_pad * 2 + c_out * kk * 2 + c_out * m_pad * 2),
    )(wmat, patches, bcol)
    return out[:, :meta["m"]].reshape(c_out, meta["n"], meta["ho"], meta["wo"])


def _conv_bn_stats(a, w, gamma, beta):
    """BN-block conv: Conv(k4,s2,p1) GEMM (bias dropped -- it cancels exactly
    under BatchNorm) with a fused per-tile per-channel sum / sum-of-squares
    epilogue. Returns the bf16 conv output plus the BatchNorm (training-mode
    batch statistics) scale & shift, to be folded into the consumer."""
    patches, wmat, meta = _conv_gemm_inputs(a, w, 4, 2, 1)
    c_out, kk, tm, gm, m, m_pad = (meta["c_out"], meta["kk"], meta["tm"],
                                   meta["gm"], meta["m"], meta["m_pad"])

    conv, stats = pl.pallas_call(
        _gemm_stats_kernel,
        grid=(gm,),
        in_specs=[pl.BlockSpec((c_out, kk), lambda i: (0, 0)),
                  pl.BlockSpec((kk, tm), lambda i: (0, i))],
        out_specs=(pl.BlockSpec((c_out, tm), lambda i: (0, i)),
                   pl.BlockSpec((1, c_out, 128), lambda i: (i, 0, 0))),
        out_shape=(jax.ShapeDtypeStruct((c_out, m_pad), jnp.bfloat16),
                   jax.ShapeDtypeStruct((gm, c_out, 128), jnp.float32)),
        compiler_params=_mosaic_params(meta["cfg"]),
        cost_estimate=pl.CostEstimate(
            flops=2 * m_pad * kk * c_out + 3 * m_pad * c_out, transcendentals=0,
            bytes_accessed=(kk * m_pad * 2 + c_out * kk * 2
                            + c_out * m_pad * 2 + gm * c_out * 128 * 4)),
    )(wmat, patches)

    # Per-channel batch statistics. Padded M columns are exact zeros of the
    # bias-free conv, so they contribute nothing; divide by the true M.
    st = jnp.sum(stats, axis=0)                           # (C_out, 128)
    mean = st[:, 0] / m
    # TODO(synk): single-pass E[x^2]-E[x]^2 in f32 can cancel when |mean|>>std;
    # a Welford-style merge of per-tile (count, mean, M2) partials is safer.
    var = jnp.maximum(st[:, 1] / m - mean * mean, 0.0)    # biased var (PyTorch train-mode BN)
    scale = gamma / jnp.sqrt(var + 1e-5)
    shift = beta - mean * scale
    conv = conv[:, :m].reshape(c_out, meta["n"], meta["ho"], meta["wo"])
    return conv, scale, shift


def _final_conv_sigmoid(a, w, b):
    """Final Conv(k4,s2,p0, C_out=1) + Sigmoid. Output is 1x1 spatial with a
    single channel (M = N total work): done as a plain dot since a dedicated
    Pallas launch would cost more than the compute."""
    n = a.shape[1]
    patches, ho, wo = _im2col(a, 4, 2, 0)                 # (K, M)
    wmat = w.reshape(1, -1).astype(jnp.float32)
    logits = wmat @ patches.astype(jnp.float32) + b.reshape(1, 1)
    out = jax.nn.sigmoid(logits)                          # (1, M)
    return out.reshape(1, n, ho, wo).transpose(1, 0, 2, 3)   # NCHW


# ----------------------------------------------------------------------------
# Discriminator
# ----------------------------------------------------------------------------
def init_params(key, channels_img, features_d):
    fd = features_d
    dims = [
        (fd, channels_img),      # conv1
        (fd * 2, fd),            # conv2 (+BN; bias kept for parity but cancels)
        (fd * 4, fd * 2),        # conv3 (+BN)
        (fd * 8, fd * 4),        # conv4 (+BN)
        (1, fd * 8),             # conv5
    ]
    params = {}
    for idx, (co, ci) in enumerate(dims, start=1):
        key, wk, bk = jax.random.split(key, 3)
        params[f"w{idx}"] = 0.02 * jax.random.normal(wk, (co, ci, 4, 4), jnp.float32)
        params[f"b{idx}"] = 0.02 * jax.random.normal(bk, (co,), jnp.float32)
    for idx, co in [(2, fd * 2), (3, fd * 4), (4, fd * 8)]:
        params[f"gamma{idx}"] = jnp.ones((co,), jnp.float32)
        params[f"beta{idx}"] = jnp.zeros((co,), jnp.float32)
    return params


def discriminator_forward(params, x):
    # Single entry transpose NCHW -> channel-major (C, N, H, W); all internal
    # activations stay channel-major bf16 so GEMM outputs are lane-dense in M.
    a = jnp.transpose(x, (1, 0, 2, 3)).astype(jnp.bfloat16)

    # Block 1: Conv + bias + LeakyReLU (fused in the GEMM kernel).
    a = _conv_lrelu(a, params["w1"], params["b1"])

    # Blocks 2-4: Conv (fused BN-statistics epilogue); the BatchNorm normalize
    # + LeakyReLU is a per-channel affine applied here in plain JAX so XLA
    # fuses it into the next layer's patch construction (no standalone BN pass;
    # conv zero padding is applied after the activation, matching PyTorch).
    # NOTE: BatchNorm uses batch statistics (PyTorch default train() mode).
    for idx in (2, 3, 4):
        conv, scale, shift = _conv_bn_stats(a, params[f"w{idx}"],
                                            params[f"gamma{idx}"],
                                            params[f"beta{idx}"])
        y = (conv.astype(jnp.float32) * scale[:, None, None, None]
             + shift[:, None, None, None])
        a = jnp.where(y >= 0.0, y, 0.2 * y).astype(jnp.bfloat16)

    # Block 5: Conv + Sigmoid -> (N, 1, 1, 1) for 64x64 input.
    return _final_conv_sigmoid(a, params["w5"], params["b5"])


if __name__ == "__main__":
    key = jax.random.PRNGKey(0)
    channels_img, features_d = 3, 8
    params = init_params(key, channels_img, features_d)

    # DCGAN discriminator architecturally requires 64x64 spatial input.
    x = jax.random.normal(jax.random.PRNGKey(0), (2, channels_img, 64, 64),
                          jnp.float32)

    fwd = jax.jit(discriminator_forward)
    out = jax.block_until_ready(fwd(params, x))

    assert out.shape == (2, 1, 1, 1), out.shape
    assert bool(jnp.all(jnp.isfinite(out)))
    assert bool(jnp.all((out >= 0.0) & (out <= 1.0)))
    print("KERNEL_OK")
</pallas_src>

<mosaic_0001>
module attributes {stable_mosaic.version = 11 : i64} {
  func.func @_gemm_bias_lrelu_kernel(%arg0: i32, %arg1: memref<8x48xbf16, #tpu.memory_space<vmem>>, %arg2: memref<48x1024xbf16, #tpu.memory_space<vmem>>, %arg3: memref<8x1xf32, #tpu.memory_space<vmem>>, %arg4: memref<8x1024xbf16, #tpu.memory_space<vmem>>) attributes {dimension_semantics = [#tpu.dimension_semantics<parallel>], iteration_bounds = array<i64: 2>, scalar_prefetch = 0 : i64, scratch_operands = 0 : i64, tpu.core_type = #tpu.core_type<tc>, window_params = [{pipeline_mode = #tpu.pipeline_mode<synchronous>, transform_indices = @transform_0, window_bounds = array<i64: 8, 48>}, {transform_indices = @transform_1, window_bounds = array<i64: 48, 1024>}, {pipeline_mode = #tpu.pipeline_mode<synchronous>, transform_indices = @transform_2, window_bounds = array<i64: 8, 1>}, {transform_indices = @transform_3, window_bounds = array<i64: 8, 1024>}]} {
    %c0 = arith.constant 0 : index
    %c0_0 = arith.constant 0 : index
    %0 = vector.load %arg1[%c0, %c0_0] : memref<8x48xbf16, #tpu.memory_space<vmem>>, vector<8x48xbf16>
    %c0_1 = arith.constant 0 : index
    %c0_2 = arith.constant 0 : index
    %1 = vector.load %arg2[%c0_1, %c0_2] : memref<48x1024xbf16, #tpu.memory_space<vmem>>, vector<48x1024xbf16>
    %cst = arith.constant dense<0.000000e+00> : vector<8x1024xf32>
    %2 = tpu.matmul %0, %1, %cst {dimension_numbers = #tpu.dot_dimension_numbers<[1], [0], [0], [1], [0, 0, 1, 1], [], []>} : vector<8x48xbf16>, vector<48x1024xbf16>, vector<8x1024xf32> -> vector<8x1024xf32>
    %c0_3 = arith.constant 0 : index
    %c0_4 = arith.constant 0 : index
    %3 = vector.load %arg3[%c0_3, %c0_4] : memref<8x1xf32, #tpu.memory_space<vmem>>, vector<8x1xf32>
    %4 = vector.broadcast %3 : vector<8x1xf32> to vector<8x1024xf32>
    %5 = arith.addf %2, %4 : vector<8x1024xf32>
    %cst_5 = arith.constant 0.000000e+00 : f32
    %6 = vector.broadcast %cst_5 : f32 to vector<8x1024xf32>
    %7 = arith.cmpf oge, %5, %6 : vector<8x1024xf32>
    %cst_6 = arith.constant 2.000000e-01 : f32
    %8 = vector.broadcast %cst_6 : f32 to vector<8x1024xf32>
    %9 = arith.mulf %8, %5 : vector<8x1024xf32>
    %10 = arith.select %7, %5, %9 : vector<8x1024xi1>, vector<8x1024xf32>
    %11 = arith.truncf %10 : vector<8x1024xf32> to vector<8x1024xbf16>
    %c0_7 = arith.constant 0 : index
    %c0_8 = arith.constant 0 : index
    %12 = vector.load %arg4[%c0_7, %c0_8] : memref<8x1024xbf16, #tpu.memory_space<vmem>>, vector<8x1024xbf16>
    tpu.vector_store %arg4[%c0_7, %c0_8], %11 {strides = array<i32>} : memref<8x1024xbf16, #tpu.memory_space<vmem>>, vector<8x1024xbf16>,
    return
  }
  func.func @transform_0(%arg0: i32) -> (i32, i32) {
    %c0_i32 = arith.constant 0 : i32
    %c0_i32_0 = arith.constant 0 : i32
    %c0_i32_1 = arith.constant 0 : i32
    return %c0_i32, %c0_i32_0 : i32, i32
  }
  func.func @transform_1(%arg0: i32) -> (i32, i32) {
    %c0_i32 = arith.constant 0 : i32
    %c0_i32_0 = arith.constant 0 : i32
    return %c0_i32, %arg0 : i32, i32
  }
  func.func @transform_2(%arg0: i32) -> (i32, i32) {
    %c0_i32 = arith.constant 0 : i32
    %c0_i32_0 = arith.constant 0 : i32
    %c0_i32_1 = arith.constant 0 : i32
    return %c0_i32, %c0_i32_0 : i32, i32
  }
  func.func @transform_3(%arg0: i32) -> (i32, i32) {
    %c0_i32 = arith.constant 0 : i32
    %c0_i32_0 = arith.constant 0 : i32
    return %c0_i32, %arg0 : i32, i32
  }
}

module attributes {stable_mosaic.version = 11 : i64} {
  func.func @_gemm_stats_kernel(%arg0: i32, %arg1: memref<16x128xbf16, #tpu.memory_space<vmem>>, %arg2: memref<128x256xbf16, #tpu.memory_space<vmem>>, %arg3: memref<16x256xbf16, #tpu.memory_space<vmem>>, %arg4: memref<1x16x128xf32, #tpu.memory_space<vmem>>) attributes {dimension_semantics = [#tpu.dimension_semantics<parallel>], iteration_bounds = array<i64: 2>, scalar_prefetch = 0 : i64, scratch_operands = 0 : i64, tpu.core_type = #tpu.core_type<tc>, window_params = [{pipeline_mode = #tpu.pipeline_mode<synchronous>, transform_indices = @transform_0, window_bounds = array<i64: 16, 128>}, {transform_indices = @transform_1, window_bounds = array<i64: 128, 256>}, {transform_indices = @transform_2, window_bounds = array<i64: 16, 256>}, {transform_indices = @transform_3, window_bounds = array<i64: 1, 16, 128>}]} {
    %c0 = arith.constant 0 : index
    %c0_0 = arith.constant 0 : index
    %0 = vector.load %arg1[%c0, %c0_0] : memref<16x128xbf16, #tpu.memory_space<vmem>>, vector<16x128xbf16>
    %c0_1 = arith.constant 0 : index
    %c0_2 = arith.constant 0 : index
    %1 = vector.load %arg2[%c0_1, %c0_2] : memref<128x256xbf16, #tpu.memory_space<vmem>>, vector<128x256xbf16>
    %cst = arith.constant dense<0.000000e+00> : vector<16x256xf32>
    %2 = tpu.matmul %0, %1, %cst {dimension_numbers = #tpu.dot_dimension_numbers<[1], [0], [0], [1], [0, 0, 1, 1], [], []>} : vector<16x128xbf16>, vector<128x256xbf16>, vector<16x256xf32> -> vector<16x256xf32>
    %3 = arith.truncf %2 : vector<16x256xf32> to vector<16x256xbf16>
    %c0_3 = arith.constant 0 : index
    %c0_4 = arith.constant 0 : index
    %4 = vector.load %arg3[%c0_3, %c0_4] : memref<16x256xbf16, #tpu.memory_space<vmem>>, vector<16x256xbf16>
    tpu.vector_store %arg3[%c0_3, %c0_4], %3 {strides = array<i32>} : memref<16x256xbf16, #tpu.memory_space<vmem>>, vector<16x256xbf16>,
    %cst_5 = arith.constant dense<0.000000e+00> : vector<16xf32>
    %5 = vector.multi_reduction <add>, %2, %cst_5 [1] : vector<16x256xf32> to vector<16xf32>
    %6 = vector.shape_cast %5 : vector<16xf32> to vector<16x1xf32>
    %7 = arith.mulf %2, %2 : vector<16x256xf32>
    %cst_6 = arith.constant dense<0.000000e+00> : vector<16xf32>
    %8 = vector.multi_reduction <add>, %7, %cst_6 [1] : vector<16x256xf32> to vector<16xf32>
    %9 = vector.shape_cast %8 : vector<16xf32> to vector<16x1xf32>
    %10 = tpu.iota {dimensions = array<i32: 1>} : vector<16x128xi32>
    %c0_i32 = arith.constant 0 : i32
    %11 = vector.broadcast %c0_i32 : i32 to vector<16x128xi32>
    %12 = arith.cmpi eq, %10, %11 : vector<16x128xi32>
    %cst_7 = arith.constant 0.000000e+00 : f32
    %13 = vector.shape_cast %6 : vector<16x1xf32> to vector<16x1xf32>
    %14 = vector.broadcast %13 : vector<16x1xf32> to vector<16x128xf32>
    %15 = vector.broadcast %cst_7 : f32 to vector<16x128xf32>
    %16 = arith.select %12, %14, %15 : vector<16x128xi1>, vector<16x128xf32>
    %c1_i32 = arith.constant 1 : i32
    %17 = vector.broadcast %c1_i32 : i32 to vector<16x128xi32>
    %18 = arith.cmpi eq, %10, %17 : vector<16x128xi32>
    %cst_8 = arith.constant 0.000000e+00 : f32
    %19 = vector.shape_cast %9 : vector<16x1xf32> to vector<16x1xf32>
    %20 = vector.broadcast %19 : vector<16x1xf32> to vector<16x128xf32>
    %21 = vector.broadcast %cst_8 : f32 to vector<16x128xf32>
    %22 = arith.select %18, %20, %21 : vector<16x128xi1>, vector<16x128xf32>
    %23 = arith.addf %16, %22 : vector<16x128xf32>
    %c0_9 = arith.constant 0 : index
    %c0_10 = arith.constant 0 : index
    %c0_11 = arith.constant 0 : index
    %24 = vector.load %arg4[%c0_9, %c0_10, %c0_11] : memref<1x16x128xf32, #tpu.memory_space<vmem>>, vector<1x16x128xf32>
    %25 = vector.shape_cast %24 : vector<1x16x128xf32> to vector<16x128xf32>
    %26 = vector.shape_cast %23 : vector<16x128xf32> to vector<1x16x128xf32>
    tpu.vector_store %arg4[%c0_9, %c0_10, %c0_11], %26 {strides = array<i32>} : memref<1x16x128xf32, #tpu.memory_space<vmem>>, vector<1x16x128xf32>,
    return
  }
  func.func @transform_0(%arg0: i32) -> (i32, i32) {
    %c0_i32 = arith.constant 0 : i32
    %c0_i32_0 = arith.constant 0 : i32
    %c0_i32_1 = arith.constant 0 : i32
    return %c0_i32, %c0_i32_0 : i32, i32
  }
  func.func @transform_1(%arg0: i32) -> (i32, i32) {
    %c0_i32 = arith.constant 0 : i32
    %c0_i32_0 = arith.constant 0 : i32
    return %c0_i32, %arg0 : i32, i32
  }
  func.func @transform_2(%arg0: i32) -> (i32, i32) {
    %c0_i32 = arith.constant 0 : i32
    %c0_i32_0 = arith.constant 0 : i32
    return %c0_i32, %arg0 : i32, i32
  }
  func.func @transform_3(%arg0: i32) -> (i32, i32, i32) {
    %c0_i32 = arith.constant 0 : i32
    %c0_i32_0 = arith.constant 0 : i32
    %c0_i32_1 = arith.constant 0 : i32
    return %arg0, %c0_i32, %c0_i32_0 : i32, i32, i32
  }
}

module attributes {stable_mosaic.version = 11 : i64} {
  func.func @_gemm_stats_kernel(%arg0: i32, %arg1: memref<32x256xbf16, #tpu.memory_space<vmem>>, %arg2: memref<256x128xbf16, #tpu.memory_space<vmem>>, %arg3: memref<32x128xbf16, #tpu.memory_space<vmem>>, %arg4: memref<1x32x128xf32, #tpu.memory_space<vmem>>) attributes {dimension_semantics = [#tpu.dimension_semantics<parallel>], iteration_bounds = array<i64: 1>, scalar_prefetch = 0 : i64, scratch_operands = 0 : i64, tpu.core_type = #tpu.core_type<tc>, window_params = [{pipeline_mode = #tpu.pipeline_mode<synchronous>, transform_indices = @transform_0, window_bounds = array<i64: 32, 256>}, {transform_indices = @transform_1, window_bounds = array<i64: 256, 128>}, {transform_indices = @transform_2, window_bounds = array<i64: 32, 128>}, {transform_indices = @transform_3, window_bounds = array<i64: 1, 32, 128>}]} {
    %c0 = arith.constant 0 : index
    %c0_0 = arith.constant 0 : index
    %0 = vector.load %arg1[%c0, %c0_0] : memref<32x256xbf16, #tpu.memory_space<vmem>>, vector<32x256xbf16>
    %c0_1 = arith.constant 0 : index
    %c0_2 = arith.constant 0 : index
    %1 = vector.load %arg2[%c0_1, %c0_2] : memref<256x128xbf16, #tpu.memory_space<vmem>>, vector<256x128xbf16>
    %cst = arith.constant dense<0.000000e+00> : vector<32x128xf32>
    %2 = tpu.matmul %0, %1, %cst {dimension_numbers = #tpu.dot_dimension_numbers<[1], [0], [0], [1], [0, 0, 1, 1], [], []>} : vector<32x256xbf16>, vector<256x128xbf16>, vector<32x128xf32> -> vector<32x128xf32>
    %3 = arith.truncf %2 : vector<32x128xf32> to vector<32x128xbf16>
    %c0_3 = arith.constant 0 : index
    %c0_4 = arith.constant 0 : index
    %4 = vector.load %arg3[%c0_3, %c0_4] : memref<32x128xbf16, #tpu.memory_space<vmem>>, vector<32x128xbf16>
    tpu.vector_store %arg3[%c0_3, %c0_4], %3 {strides = array<i32>} : memref<32x128xbf16, #tpu.memory_space<vmem>>, vector<32x128xbf16>,
    %cst_5 = arith.constant dense<0.000000e+00> : vector<32xf32>
    %5 = vector.multi_reduction <add>, %2, %cst_5 [1] : vector<32x128xf32> to vector<32xf32>
    %6 = vector.shape_cast %5 : vector<32xf32> to vector<32x1xf32>
    %7 = arith.mulf %2, %2 : vector<32x128xf32>
    %cst_6 = arith.constant dense<0.000000e+00> : vector<32xf32>
    %8 = vector.multi_reduction <add>, %7, %cst_6 [1] : vector<32x128xf32> to vector<32xf32>
    %9 = vector.shape_cast %8 : vector<32xf32> to vector<32x1xf32>
    %10 = tpu.iota {dimensions = array<i32: 1>} : vector<32x128xi32>
    %c0_i32 = arith.constant 0 : i32
    %11 = vector.broadcast %c0_i32 : i32 to vector<32x128xi32>
    %12 = arith.cmpi eq, %10, %11 : vector<32x128xi32>
    %cst_7 = arith.constant 0.000000e+00 : f32
    %13 = vector.shape_cast %6 : vector<32x1xf32> to vector<32x1xf32>
    %14 = vector.broadcast %13 : vector<32x1xf32> to vector<32x128xf32>
    %15 = vector.broadcast %cst_7 : f32 to vector<32x128xf32>
    %16 = arith.select %12, %14, %15 : vector<32x128xi1>, vector<32x128xf32>
    %c1_i32 = arith.constant 1 : i32
    %17 = vector.broadcast %c1_i32 : i32 to vector<32x128xi32>
    %18 = arith.cmpi eq, %10, %17 : vector<32x128xi32>
    %cst_8 = arith.constant 0.000000e+00 : f32
    %19 = vector.shape_cast %9 : vector<32x1xf32> to vector<32x1xf32>
    %20 = vector.broadcast %19 : vector<32x1xf32> to vector<32x128xf32>
    %21 = vector.broadcast %cst_8 : f32 to vector<32x128xf32>
    %22 = arith.select %18, %20, %21 : vector<32x128xi1>, vector<32x128xf32>
    %23 = arith.addf %16, %22 : vector<32x128xf32>
    %c0_9 = arith.constant 0 : index
    %c0_10 = arith.constant 0 : index
    %c0_11 = arith.constant 0 : index
    %24 = vector.load %arg4[%c0_9, %c0_10, %c0_11] : memref<1x32x128xf32, #tpu.memory_space<vmem>>, vector<1x32x128xf32>
    %25 = vector.shape_cast %24 : vector<1x32x128xf32> to vector<32x128xf32>
    %26 = vector.shape_cast %23 : vector<32x128xf32> to vector<1x32x128xf32>
    tpu.vector_store %arg4[%c0_9, %c0_10, %c0_11], %26 {strides = array<i32>} : memref<1x32x128xf32, #tpu.memory_space<vmem>>, vector<1x32x128xf32>,
    return
  }
  func.func @transform_0(%arg0: i32) -> (i32, i32) {
    %c0_i32 = arith.constant 0 : i32
    %c0_i32_0 = arith.constant 0 : i32
    %c0_i32_1 = arith.constant 0 : i32
    return %c0_i32, %c0_i32_0 : i32, i32
  }
  func.func @transform_1(%arg0: i32) -> (i32, i32) {
    %c0_i32 = arith.constant 0 : i32
    %c0_i32_0 = arith.constant 0 : i32
    return %c0_i32, %arg0 : i32, i32
  }
  func.func @transform_2(%arg0: i32) -> (i32, i32) {
    %c0_i32 = arith.constant 0 : i32
    %c0_i32_0 = arith.constant 0 : i32
    return %c0_i32, %arg0 : i32, i32
  }
  func.func @transform_3(%arg0: i32) -> (i32, i32, i32) {
    %c0_i32 = arith.constant 0 : i32
    %c0_i32_0 = arith.constant 0 : i32
    %c0_i32_1 = arith.constant 0 : i32
    return %arg0, %c0_i32, %c0_i32_0 : i32, i32, i32
  }
}

module attributes {stable_mosaic.version = 11 : i64} {
  func.func @_gemm_stats_kernel(%arg0: i32, %arg1: memref<64x512xbf16, #tpu.memory_space<vmem>>, %arg2: memref<512x128xbf16, #tpu.memory_space<vmem>>, %arg3: memref<64x128xbf16, #tpu.memory_space<vmem>>, %arg4: memref<1x64x128xf32, #tpu.memory_space<vmem>>) attributes {dimension_semantics = [#tpu.dimension_semantics<parallel>], iteration_bounds = array<i64: 1>, scalar_prefetch = 0 : i64, scratch_operands = 0 : i64, tpu.core_type = #tpu.core_type<tc>, window_params = [{pipeline_mode = #tpu.pipeline_mode<synchronous>, transform_indices = @transform_0, window_bounds = array<i64: 64, 512>}, {transform_indices = @transform_1, window_bounds = array<i64: 512, 128>}, {transform_indices = @transform_2, window_bounds = array<i64: 64, 128>}, {transform_indices = @transform_3, window_bounds = array<i64: 1, 64, 128>}]} {
    %c0 = arith.constant 0 : index
    %c0_0 = arith.constant 0 : index
    %0 = vector.load %arg1[%c0, %c0_0] : memref<64x512xbf16, #tpu.memory_space<vmem>>, vector<64x512xbf16>
    %c0_1 = arith.constant 0 : index
    %c0_2 = arith.constant 0 : index
    %1 = vector.load %arg2[%c0_1, %c0_2] : memref<512x128xbf16, #tpu.memory_space<vmem>>, vector<512x128xbf16>
    %cst = arith.constant dense<0.000000e+00> : vector<64x128xf32>
    %2 = tpu.matmul %0, %1, %cst {dimension_numbers = #tpu.dot_dimension_numbers<[1], [0], [0], [1], [0, 0, 1, 1], [], []>} : vector<64x512xbf16>, vector<512x128xbf16>, vector<64x128xf32> -> vector<64x128xf32>
    %3 = arith.truncf %2 : vector<64x128xf32> to vector<64x128xbf16>
    %c0_3 = arith.constant 0 : index
    %c0_4 = arith.constant 0 : index
    %4 = vector.load %arg3[%c0_3, %c0_4] : memref<64x128xbf16, #tpu.memory_space<vmem>>, vector<64x128xbf16>
    tpu.vector_store %arg3[%c0_3, %c0_4], %3 {strides = array<i32>} : memref<64x128xbf16, #tpu.memory_space<vmem>>, vector<64x128xbf16>,
    %cst_5 = arith.constant dense<0.000000e+00> : vector<64xf32>
    %5 = vector.multi_reduction <add>, %2, %cst_5 [1] : vector<64x128xf32> to vector<64xf32>
    %6 = vector.shape_cast %5 : vector<64xf32> to vector<64x1xf32>
    %7 = arith.mulf %2, %2 : vector<64x128xf32>
    %cst_6 = arith.constant dense<0.000000e+00> : vector<64xf32>
    %8 = vector.multi_reduction <add>, %7, %cst_6 [1] : vector<64x128xf32> to vector<64xf32>
    %9 = vector.shape_cast %8 : vector<64xf32> to vector<64x1xf32>
    %10 = tpu.iota {dimensions = array<i32: 1>} : vector<64x128xi32>
    %c0_i32 = arith.constant 0 : i32
    %11 = vector.broadcast %c0_i32 : i32 to vector<64x128xi32>
    %12 = arith.cmpi eq, %10, %11 : vector<64x128xi32>
    %cst_7 = arith.constant 0.000000e+00 : f32
    %13 = vector.shape_cast %6 : vector<64x1xf32> to vector<64x1xf32>
    %14 = vector.broadcast %13 : vector<64x1xf32> to vector<64x128xf32>
    %15 = vector.broadcast %cst_7 : f32 to vector<64x128xf32>
    %16 = arith.select %12, %14, %15 : vector<64x128xi1>, vector<64x128xf32>
    %c1_i32 = arith.constant 1 : i32
    %17 = vector.broadcast %c1_i32 : i32 to vector<64x128xi32>
    %18 = arith.cmpi eq, %10, %17 : vector<64x128xi32>
    %cst_8 = arith.constant 0.000000e+00 : f32
    %19 = vector.shape_cast %9 : vector<64x1xf32> to vector<64x1xf32>
    %20 = vector.broadcast %19 : vector<64x1xf32> to vector<64x128xf32>
    %21 = vector.broadcast %cst_8 : f32 to vector<64x128xf32>
    %22 = arith.select %18, %20, %21 : vector<64x128xi1>, vector<64x128xf32>
    %23 = arith.addf %16, %22 : vector<64x128xf32>
    %c0_9 = arith.constant 0 : index
    %c0_10 = arith.constant 0 : index
    %c0_11 = arith.constant 0 : index
    %24 = vector.load %arg4[%c0_9, %c0_10, %c0_11] : memref<1x64x128xf32, #tpu.memory_space<vmem>>, vector<1x64x128xf32>
    %25 = vector.shape_cast %24 : vector<1x64x128xf32> to vector<64x128xf32>
    %26 = vector.shape_cast %23 : vector<64x128xf32> to vector<1x64x128xf32>
    tpu.vector_store %arg4[%c0_9, %c0_10, %c0_11], %26 {strides = array<i32>} : memref<1x64x128xf32, #tpu.memory_space<vmem>>, vector<1x64x128xf32>,
    return
  }
  func.func @transform_0(%arg0: i32) -> (i32, i32) {
    %c0_i32 = arith.constant 0 : i32
    %c0_i32_0 = arith.constant 0 : i32
    %c0_i32_1 = arith.constant 0 : i32
    return %c0_i32, %c0_i32_0 : i32, i32
  }
  func.func @transform_1(%arg0: i32) -> (i32, i32) {
    %c0_i32 = arith.constant 0 : i32
    %c0_i32_0 = arith.constant 0 : i32
    return %c0_i32, %arg0 : i32, i32
  }
  func.func @transform_2(%arg0: i32) -> (i32, i32) {
    %c0_i32 = arith.constant 0 : i32
    %c0_i32_0 = arith.constant 0 : i32
    return %c0_i32, %arg0 : i32, i32
  }
  func.func @transform_3(%arg0: i32) -> (i32, i32, i32) {
    %c0_i32 = arith.constant 0 : i32
    %c0_i32_0 = arith.constant 0 : i32
    %c0_i32_1 = arith.constant 0 : i32
    return %arg0, %c0_i32, %c0_i32_0 : i32, i32, i32
  }
}

</mosaic_0001>

<llo_original>
// kernel: discriminator_forward.4
$region0: #{discriminator_forward.4}
  #allocation0 [shape = 'u32[]', space=smem, size = 0x4, offset = 0x4, fixed_abs, tag = 'smem constant byte address 0x4 - core index']
  #allocation1 [shape = 'u32[72,128]{1,0:T(1,128)}', space=vmem, size = 0x9000, scoped, tag = 'internal scratch']
  %s0 = inlined_call_operand.vmem [shape: bf16[8,48], index: 0, kind: input, shape index: {}]
  %s1 = inlined_call_operand.vmem [shape: bf16[48,2048], index: 1, kind: input, shape index: {}]
  %s2 = inlined_call_operand.vmem [shape: f32[8,1], index: 2, kind: input, shape index: {}]
  %s3 = inlined_call_operand.vmem [shape: bf16[8,2048], index: 3, kind: output, shape index: {}]
  %s4 = sld [smem:[#allocation0]]
  $region68: #{discriminator_forward.4} parent=0
    _
  %s6 = ssub.s32 1, %s4
  %s7 = scalar_select 0, %s6, %s4
  $region1: #{discriminator_forward.4} parent=0
    #allocation2 [shape = 'u8[196608]{0}', space=vmem, size = 0x30000, scoped, tag = 'input window, operand 1']
    loop: start=0, step=1, limit=4
    $region2: #{discriminator_forward.4} parent=1 // loop_pre_header
      _
    $region3: #{discriminator_forward.4} parent=1 // loop_header
      %s9 = sphi 0, %s13
      %p10 = scmp.ge.s32.totalorder %s9, 4
      %s17 = sphi 0, %s17
      %s19 = sphi 0, %s17
      %s20 = sphi 0, %s19
      %s34 = sphi 0, %s20
      %s40 = sphi 0, %s42
      %s43 = sphi 0, %s40
      %s44 = sphi 0, %s43
      %s60 = sphi 0, %s44
      %s64 = sphi 0, %s64
      %s66 = sphi 0, %s64
      %s67 = sphi 0, %s66
      %s81 = sphi 0, %s67
      %s87 = sphi 0, %s89
      %s90 = sphi 0, %s87
      %s91 = sphi 0, %s90
      %s107 = sphi 0, %s91
    $region4: #{discriminator_forward.4} parent=1 // loop_header_branch
      %12 = sbr.rel (%p10) target = $region8
    $region5: #{discriminator_forward.4} parent=1 // loop_body
      %s14 = ssub.s32 %s9, 1
      %s15 = ssub.s32 %s9, 2
      %s16 = sadd.s32 %s9, 1
      %s18 = sadd.s32 %s17, 1
      %p21 = scmp.eq.s32.totalorder %s9, 1
      %p22 = scmp.ne.s32.totalorder %s17, %s19
      %p23 = scmp.eq.s32.totalorder %s9, 0
      %p24 = por %p22, %p23
      %p25 = scmp.ne.s32.totalorder %s17, %s19
      %p26 = scmp.eq.s32.totalorder %s14, 1
      %p27 = por %p25, %p26
      %p28 = scmp.ne.s32.totalorder %s19, %s20
      %p29 = scmp.eq.s32.totalorder %s14, 0
      %p30 = por %p28, %p29
      %p31 = scmp.ne.s32.totalorder %s19, %s20
      %p32 = scmp.eq.s32.totalorder %s15, 1
      %p33 = por %p31, %p32
      %p35 = scmp.ne.s32.totalorder %s20, %s34
      %p36 = scmp.eq.s32.totalorder %s15, 0
      %p37 = por %p35, %p36
      %s38 = ssub.s32 %s9, %s16
      %p39 = scmp.eq.s32.totalorder %s38, 0
      %s41 = sadd.s32 %s40, 1
      %s42 = scalar_select %p39, %s40, %s41
      %p45 = pneg %p39
      %p46 = scmp.eq.s32.totalorder %s9, 1
      %p47 = por %p45, %p46
      %p48 = scmp.ne.s32.totalorder %s40, %s43
      %p49 = scmp.eq.s32.totalorder %s9, 0
      %p50 = por %p48, %p49
      %p51 = scmp.ne.s32.totalorder %s40, %s43
      %p52 = scmp.eq.s32.totalorder %s14, 1
      %p53 = por %p51, %p52
      %p54 = scmp.ne.s32.totalorder %s43, %s44
      %p55 = scmp.eq.s32.totalorder %s14, 0
      %p56 = por %p54, %p55
      %p57 = scmp.ne.s32.totalorder %s43, %s44
      %p58 = scmp.eq.s32.totalorder %s15, 1
      %p59 = por %p57, %p58
      %p61 = scmp.ne.s32.totalorder %s44, %s60
      %p62 = scmp.eq.s32.totalorder %s15, 0
      %p63 = por %p61, %p62
      %s65 = sadd.s32 %s64, 1
      %p68 = scmp.eq.s32.totalorder %s9, 1
      %p69 = scmp.ne.s32.totalorder %s64, %s66
      %p70 = scmp.eq.s32.totalorder %s9, 0
      %p71 = por %p69, %p70
      %p72 = scmp.ne.s32.totalorder %s64, %s66
      %p73 = scmp.eq.s32.totalorder %s14, 1
      %p74 = por %p72, %p73
      %p75 = scmp.ne.s32.totalorder %s66, %s67
      %p76 = scmp.eq.s32.totalorder %s14, 0
      %p77 = por %p75, %p76
      %p78 = scmp.ne.s32.totalorder %s66, %s67
      %p79 = scmp.eq.s32.totalorder %s15, 1
      %p80 = por %p78, %p79
      %p82 = scmp.ne.s32.totalorder %s67, %s81
      %p83 = scmp.eq.s32.totalorder %s15, 0
      %p84 = por %p82, %p83
      %s85 = ssub.s32 %s9, %s16
      %p86 = scmp.eq.s32.totalorder %s85, 0
      %s88 = sadd.s32 %s87, 1
      %s89 = scalar_select %p86, %s87, %s88
      %p92 = pneg %p86
      %p93 = scmp.eq.s32.totalorder %s9, 1
      %p94 = por %p92, %p93
      %p95 = scmp.ne.s32.totalorder %s87, %s90
      %p96 = scmp.eq.s32.totalorder %s9, 0
      %p97 = por %p95, %p96
      %p98 = scmp.ne.s32.totalorder %s87, %s90
      %p99 = scmp.eq.s32.totalorder %s14, 1
      %p100 = por %p98, %p99
      %p101 = scmp.ne.s32.totalorder %s90, %s91
      %p102 = scmp.eq.s32.totalorder %s14, 0
      %p103 = por %p101, %p102
      %p104 = scmp.ne.s32.totalorder %s90, %s91
      %p105 = scmp.eq.s32.totalorder %s15, 1
      %p106 = por %p104, %p105
      %p108 = scmp.ne.s32.totalorder %s91, %s107
      %p109 = scmp.eq.s32.totalorder %s15, 0
      %p110 = por %p108, %p109
      %p111 = scmp.le.s32.totalorder 1, %s9
      %p112 = scmp.lt.s32.totalorder %s9, 3
      %p113 = pnand %p111, %p112
      %p114 = pneg %p113
      // Predicated region
      $region9: #{discriminator_forward.4} parent=5 // pred_check
        _
      $region10: #{discriminator_forward.4} parent=5 // pred_check_branch
        %116 = sbr.rel (%p113) target = $region12
      $region11: #{discriminator_forward.4} parent=5 // pred_region
        %s117 = ssub.s32 %s9, 1
        // Predicated region
        $region13: #{discriminator_forward.4} parent=11 // pred_check
          %p118 = pneg %p30
        $region14: #{discriminator_forward.4} parent=11 // pred_check_branch
          %120 = sbr.rel (%p118) target = $region16
        $region15: #{discriminator_forward.4} parent=11 // pred_region
          _
        $region16: #{discriminator_forward.4} parent=11 // pred_fallthru
          _
        // Predicated region
        $region17: #{discriminator_forward.4} parent=11 // pred_check
          %p121 = pneg %p77
        $region18: #{discriminator_forward.4} parent=11 // pred_check_branch
          %123 = sbr.rel (%p121) target = $region20
        $region19: #{discriminator_forward.4} parent=11 // pred_region
          _
        $region20: #{discriminator_forward.4} parent=11 // pred_fallthru
          _
      $region12: #{discriminator_forward.4} parent=5 // pred_fallthru
        _
      %p124 = scmp.lt.s32.totalorder %s9, 2
      // Predicated region
      $region21: #{discriminator_forward.4} parent=5 // pred_check
        %p125 = pneg %p124
      $region22: #{discriminator_forward.4} parent=5 // pred_check_branch
        %127 = sbr.rel (%p125) target = $region24
      $region23: #{discriminator_forward.4} parent=5 // pred_region
        // Predicated region
        $region25: #{discriminator_forward.4} parent=23 // pred_check
          %p128 = pneg %p50
        $region26: #{discriminator_forward.4} parent=23 // pred_check_branch
          %130 = sbr.rel (%p128) target = $region28
        $region27: #{discriminator_forward.4} parent=23 // pred_region
          %s131 = sand.u32 %s40, 1
          %s132 = sand.u32 %s40, 1
          %s133 = smul.addr %s132, 192
          %s134 = scalar_lea.vmem [#allocation2], %s133
          %s135 = smul.u32 8, %s9
          %s136 = smul.addr %s135, 4
          %s137 = scalar_lea.vmem %s1, %s136
          // Predicated region
          $region29: #{discriminator_forward.4} parent=27 // pred_check
            _
          $region30: #{discriminator_forward.4} parent=27 // pred_check_branch
            %139 = sbr.rel (0) target = $region32
          $region31: #{discriminator_forward.4} parent=27 // pred_region
            // Predicated region
            $region33: #{discriminator_forward.4} parent=31 // pred_check
              _
            $region34: #{discriminator_forward.4} parent=31 // pred_check_branch
              %141 = sbr.rel (0) target = $region36
            $region35: #{discriminator_forward.4} parent=31 // pred_region
              loop: start=0, step=1, limit=1
              $region37: #{discriminator_forward.4} parent=35 // loop_pre_header
                _
              $region38: #{discriminator_forward.4} parent=35 // loop_header
                %s143 = sphi 0, %s147
                %p144 = scmp.ge.s32.totalorder %s143, 1
                %s148 = sphi %s137, %s137
                %s149 = sphi %s134, %s134
              $region39: #{discriminator_forward.4} parent=35 // loop_header_branch
                %146 = sbr.rel (%p144) target = $region43
              $region40: #{discriminator_forward.4} parent=35 // loop_body
                %v150 = vld [vmem:[%s148] sm:$0xff]
                %151 = vst [vmem:[%s149] sm:$0xff] %v150
                %v152 = vld [vmem:[%s148 + $0x8] sm:$0xff]
                %153 = vst [vmem:[%s149 + $0x8] sm:$0xff] %v152
                %v154 = vld [vmem:[%s148 + $0x10] sm:$0xff]
                %155 = vst [vmem:[%s149 + $0x10] sm:$0xff] %v154
                %v156 = vld [vmem:[%s148 + $0x18] sm:$0xff]
                %157 = vst [vmem:[%s149 + $0x18] sm:$0xff] %v156
                %v158 = vld [vmem:[%s148 + $0x40] sm:$0xff]
                %159 = vst [vmem:[%s149 + $0x20] sm:$0xff] %v158
                %v160 = vld [vmem:[%s148 + $0x48] sm:$0xff]
                %161 = vst [vmem:[%s149 + $0x28] sm:$0xff] %v160
                %v162 = vld [vmem:[%s148 + $0x50] sm:$0xff]
                %163 = vst [vmem:[%s149 + $0x30] sm:$0xff] %v162
                %v164 = vld [vmem:[%s148 + $0x58] sm:$0xff]
                %165 = vst [vmem:[%s149 + $0x38] sm:$0xff] %v164
                %v166 = vld [vmem:[%s148 + $0x80] sm:$0xff]
                %167 = vst [vmem:[%s149 + $0x40] sm:$0xff] %v166
                %v168 = vld [vmem:[%s148 + $0x88] sm:$0xff]
                %169 = vst [vmem:[%s149 + $0x48] sm:$0xff] %v168
                %v170 = vld [vmem:[%s148 + $0x90] sm:$0xff]
                %171 = vst [vmem:[%s149 + $0x50] sm:$0xff] %v170
                %v172 = vld [vmem:[%s148 + $0x98] sm:$0xff]
                %173 = vst [vmem:[%s149 + $0x58] sm:$0xff] %v172
                %v174 = vld [vmem:[%s148 + $0xc0] sm:$0xff]
                %175 = vst [vmem:[%s149 + $0x60] sm:$0xff] %v174
                %v176 = vld [vmem:[%s148 + $0xc8] sm:$0xff]
                %177 = vst [vmem:[%s149 + $0x68] sm:$0xff] %v176
                %v178 = vld [vmem:[%s148 + $0xd0] sm:$0xff]
                %179 = vst [vmem:[%s149 + $0x70] sm:$0xff] %v178
                %v180 = vld [vmem:[%s148 + $0xd8] sm:$0xff]
                %181 = vst [vmem:[%s149 + $0x78] sm:$0xff] %v180
                %v182 = vld [vmem:[%s148 + $0x100] sm:$0xff]
                %183 = vst [vmem:[%s149 + $0x80] sm:$0xff] %v182
                %v184 = vld [vmem:[%s148 + $0x108] sm:$0xff]
                %185 = vst [vmem:[%s149 + $0x88] sm:$0xff] %v184
                %v186 = vld [vmem:[%s148 + $0x110] sm:$0xff]
                %187 = vst [vmem:[%s149 + $0x90] sm:$0xff] %v186
                %v188 = vld [vmem:[%s148 + $0x118] sm:$0xff]
                %189 = vst [vmem:[%s149 + $0x98] sm:$0xff] %v188
                %v190 = vld [vmem:[%s148 + $0x140] sm:$0xff]
                %191 = vst [vmem:[%s149 + $0xa0] sm:$0xff] %v190
                %v192 = vld [vmem:[%s148 + $0x148] sm:$0xff]
                %193 = vst [vmem:[%s149 + $0xa8] sm:$0xff] %v192
                %v194 = vld [vmem:[%s148 + $0x150] sm:$0xff]
                %195 = vst [vmem:[%s149 + $0xb0] sm:$0xff] %v194
                %v196 = vld [vmem:[%s148 + $0x158] sm:$0xff]
                %197 = vst [vmem:[%s149 + $0xb8] sm:$0xff] %v196
              $region41: #{discriminator_forward.4} parent=35 // loop_footer
                %s147 = sadd.s32 1, %s143
              $region42: #{discriminator_forward.4} parent=35 // loop_footer_branch
                %142 = sbr.rel target = $region38
              $region43: #{discriminator_forward.4} parent=35 // loop_exit
                _
            $region36: #{discriminator_forward.4} parent=31 // pred_fallthru
              _
            // Predicated region
            $region44: #{discriminator_forward.4} parent=31 // pred_check
              _
            $region45: #{discriminator_forward.4} parent=31 // pred_check_branch
              %199 = sbr.rel target = $region47
            $region46: #{discriminator_forward.4} parent=31 // pred_region
              _
            $region47: #{discriminator_forward.4} parent=31 // pred_fallthru
              _
          $region32: #{discriminator_forward.4} parent=27 // pred_fallthru
            _
          %200 = vnop
        $region28: #{discriminator_forward.4} parent=23 // pred_fallthru
          _
      $region24: #{discriminator_forward.4} parent=5 // pred_fallthru
        _
      %p201 = scmp.le.s32.totalorder 1, %s9
      %p202 = scmp.lt.s32.totalorder %s9, 3
      %p203 = pnand %p201, %p202
      %p204 = pneg %p203
      // Predicated region
      $region48: #{discriminator_forward.4} parent=5 // pred_check
        _
      $region49: #{discriminator_forward.4} parent=5 // pred_check_branch
        %206 = sbr.rel (%p203) target = $region51
      $region50: #{discriminator_forward.4} parent=5 // pred_region
        %s207 = ssub.s32 %s9, 1
        %s208 = sand.u32 %s43, 1
        %s209 = sand.u32 %s43, 1
        %s210 = smul.addr %s209, 192
        %s211 = scalar_lea.vmem [#allocation2], %s210
        // Predicated region
        $region52: #{discriminator_forward.4} parent=50 // pred_check
          %p212 = pneg %p56
        $region53: #{discriminator_forward.4} parent=50 // pred_check_branch
          %214 = sbr.rel (%p212) target = $region55
        $region54: #{discriminator_forward.4} parent=50 // pred_region
          _
        $region55: #{discriminator_forward.4} parent=50 // pred_fallthru
          _
        %p215 = pneg %p30
        %p216 = pneg %p27
        %s217 = sand.u32 %s43, 1
        %s218 = sand.u32 %s43, 1
        %s219 = smul.addr %s218, 192
        %s220 = scalar_lea.vmem [#allocation2], %s219
        %p221 = pneg %p56
        %p222 = pneg %p53
        %p223 = pneg %p77
        %p224 = pneg %p74
        %p225 = pneg %p103
        %p226 = pneg %p100
        %s227 = smul.u32 8, %s14
        %p228 = scmp.lt.s32.totalorder %s227, 15
        %s229 = scalar_select %p228, %s227, 15
        %s230 = smul.addr %s229, 4
        %s231 = scalar_lea.vmem %s3, %s230
        %s232 = smul.u32 8, %s14
        %s233 = smul.u32 8, %s14
        %p234 = scmp.lt.s32.totalorder %s233, 15
        %s235 = scalar_select %p234, %s233, 15
        %s236 = smul.addr %s235, 4
        %s237 = scalar_lea.vmem %s3, %s236
        %s238 = smul.u32 8, %s14
        %v240 = vld [vmem:[%s0] sm:$0xf]
        %v241 = vld [vmem:[%s211] sm:$0xff]
        %v242 = vld [vmem:[%s211 + $0x8] sm:$0xff]
        %v243 = vld [vmem:[%s211 + $0x10] sm:$0xff]
        %v244 = vld [vmem:[%s211 + $0x18] sm:$0xff]
        %v245 = vld [vmem:[%s211 + $0x20] sm:$0xff]
        %v246 = vld [vmem:[%s211 + $0x28] sm:$0xff]
        %v247 = vld [vmem:[%s211 + $0x30] sm:$0xff]
        %v248 = vld [vmem:[%s211 + $0x38] sm:$0xff]
        %v249 = vld [vmem:[%s211 + $0x40] sm:$0xff]
        %v250 = vld [vmem:[%s211 + $0x48] sm:$0xff]
        %v251 = vld [vmem:[%s211 + $0x50] sm:$0xff]
        %v252 = vld [vmem:[%s211 + $0x58] sm:$0xff]
        %v253 = vld [vmem:[%s211 + $0x60] sm:$0xff]
        %v254 = vld [vmem:[%s211 + $0x68] sm:$0xff]
        %v255 = vld [vmem:[%s211 + $0x70] sm:$0xff]
        %v256 = vld [vmem:[%s211 + $0x78] sm:$0xff]
        %v257 = vld [vmem:[%s211 + $0x80] sm:$0xff]
        %v258 = vld [vmem:[%s211 + $0x88] sm:$0xff]
        %v259 = vld [vmem:[%s211 + $0x90] sm:$0xff]
        %v260 = vld [vmem:[%s211 + $0x98] sm:$0xff]
        %v261 = vld [vmem:[%s211 + $0xa0] sm:$0xff]
        %v262 = vld [vmem:[%s211 + $0xa8] sm:$0xff]
        %v263 = vld [vmem:[%s211 + $0xb0] sm:$0xff]
        %v264 = vld [vmem:[%s211 + $0xb8] sm:$0xff]
        %v265 = vld [vmem:[%s2] sm:$0xff]
        %267 = vset.pattern.permute.xlu0 0
        %268 = vperm.xlu0 %267, %v265
        %v269 = vpop.permute.xlu0 %268
        %v295 = vunpack.c.l.b16 %v241
        %v296 = vunpack.c.h.b16 %v241
        %v297 = vunpack.c.l.b16 %v242
        %v298 = vunpack.c.h.b16 %v242
        %v299 = vunpack.c.l.b16 %v243
        %v300 = vunpack.c.h.b16 %v243
        %v301 = vunpack.c.l.b16 %v244
        %v302 = vunpack.c.h.b16 %v244
        %v303 = vunpack.c.l.b16 %v245
        %v304 = vunpack.c.h.b16 %v245
        %v305 = vunpack.c.l.b16 %v246
        %v306 = vunpack.c.h.b16 %v246
        %v307 = vunpack.c.l.b16 %v247
        %v308 = vunpack.c.h.b16 %v247
        %v309 = vunpack.c.l.b16 %v248
        %v310 = vunpack.c.h.b16 %v248
        %v311 = vunpack.c.l.b16 %v249
        %v312 = vunpack.c.h.b16 %v249
        %v313 = vunpack.c.l.b16 %v250
        %v314 = vunpack.c.h.b16 %v250
        %v315 = vunpack.c.l.b16 %v251
        %v316 = vunpack.c.h.b16 %v251
        %v317 = vunpack.c.l.b16 %v252
        %v318 = vunpack.c.h.b16 %v252
        %v319 = vunpack.c.l.b16 %v253
        %v320 = vunpack.c.h.b16 %v253
        %v321 = vunpack.c.l.b16 %v254
        %v322 = vunpack.c.h.b16 %v254
        %v323 = vunpack.c.l.b16 %v255
        %v324 = vunpack.c.h.b16 %v255
        %v325 = vunpack.c.l.b16 %v256
        %v326 = vunpack.c.h.b16 %v256
        %v327 = vunpack.c.l.b16 %v257
        %v328 = vunpack.c.h.b16 %v257
        %v329 = vunpack.c.l.b16 %v258
        %v330 = vunpack.c.h.b16 %v258
        %v331 = vunpack.c.l.b16 %v259
        %v332 = vunpack.c.h.b16 %v259
        %v333 = vunpack.c.l.b16 %v260
        %v334 = vunpack.c.h.b16 %v260
        %v335 = vunpack.c.l.b16 %v261
        %v336 = vunpack.c.h.b16 %v261
        %v337 = vunpack.c.l.b16 %v262
        %v338 = vunpack.c.h.b16 %v262
        %v339 = vunpack.c.l.b16 %v263
        %v340 = vunpack.c.h.b16 %v263
        %v341 = vunpack.c.l.b16 %v264
        %v342 = vunpack.c.h.b16 %v264
        %v343 = vpack.c.b16 %v303, %v295
        %v344 = vpack.c.b16 %v304, %v296
        %v345 = vpack.c.b16 %v305, %v297
        %v346 = vpack.c.b16 %v306, %v298
        %v347 = vpack.c.b16 %v307, %v299
        %v348 = vpack.c.b16 %v308, %v300
        %v349 = vpack.c.b16 %v309, %v301
        %v350 = vpack.c.b16 %v310, %v302
        %v351 = vpack.c.b16 %v319, %v311
        %v352 = vpack.c.b16 %v320, %v312
        %v353 = vpack.c.b16 %v321, %v313
        %v354 = vpack.c.b16 %v322, %v314
        %v355 = vpack.c.b16 %v323, %v315
        %v356 = vpack.c.b16 %v324, %v316
        %v357 = vpack.c.b16 %v325, %v317
        %v358 = vpack.c.b16 %v326, %v318
        %v359 = vpack.c.b16 %v335, %v327
        %v360 = vpack.c.b16 %v336, %v328
        %v361 = vpack.c.b16 %v337, %v329
        %v362 = vpack.c.b16 %v338, %v330
        %v363 = vpack.c.b16 %v339, %v331
        %v364 = vpack.c.b16 %v340, %v332
        %v365 = vpack.c.b16 %v341, %v333
        %v366 = vpack.c.b16 %v342, %v334
        %vm391 = vcmask 392192
        %v393 = vsel %vm391, %v240, 0
        %395 = vmatpush.bf16.msra.mxu0 0
        %396 = vmatpush.bf16.msra.mxu0 0
        %397 = vmatpush.bf16.msra.mxu0 0
        %398 = vmatpush.bf16.msra.mxu0 0
        %399 = vmatpush.bf16.msra.mxu0 0
        %400 = vmatpush.bf16.msra.mxu0 %v359
        %401 = vmatpush.bf16.msra.mxu0 %v351
        %402 = vmatpush.bf16.msra.mxu0 %v343
        %403 = vmatmul.bf16.gmra.mxu0 %v393
        %v404 = vpop.f32.mrf.mxu0
        %v405 = vadd.f32 %v269, %v404
        %v406 = vpop.f32.mrf.mxu0
        %407 = vdwg.mxu0
        %408 = vmatpush.bf16.msra.mxu0 0
        %409 = vmatpush.bf16.msra.mxu0 0
        %410 = vmatpush.bf16.msra.mxu0 0
        %411 = vmatpush.bf16.msra.mxu0 0
        %412 = vmatpush.bf16.msra.mxu0 0
        %413 = vmatpush.bf16.msra.mxu0 %v360
        %414 = vmatpush.bf16.msra.mxu0 %v352
        %415 = vmatpush.bf16.msra.mxu0 %v344
        %416 = vmatmul.bf16.gmra.mxu0 %v393
        %v417 = vpop.f32.mrf.mxu0
        %v418 = vadd.f32 %v269, %v417
        %v419 = vpop.f32.mrf.mxu0
        %420 = vdwg.mxu0
        %421 = vmatpush.bf16.msra.mxu0 0
        %422 = vmatpush.bf16.msra.mxu0 0
        %423 = vmatpush.bf16.msra.mxu0 0
        %424 = vmatpush.bf16.msra.mxu0 0
        %425 = vmatpush.bf16.msra.mxu0 0
        %426 = vmatpush.bf16.msra.mxu0 %v361
        %427 = vmatpush.bf16.msra.mxu0 %v353
        %428 = vmatpush.bf16.msra.mxu0 %v345
        %429 = vmatmul.bf16.gmra.mxu0 %v393
        %v430 = vpop.f32.mrf.mxu0
        %v431 = vadd.f32 %v269, %v430
        %v432 = vpop.f32.mrf.mxu0
        %433 = vdwg.mxu0
        %434 = vmatpush.bf16.msra.mxu0 0
        %435 = vmatpush.bf16.msra.mxu0 0
        %436 = vmatpush.bf16.msra.mxu0 0
        %437 = vmatpush.bf16.msra.mxu0 0
        %438 = vmatpush.bf16.msra.mxu0 0
        %439 = vmatpush.bf16.msra.mxu0 %v362
        %440 = vmatpush.bf16.msra.mxu0 %v354
        %441 = vmatpush.bf16.msra.mxu0 %v346
        %442 = vmatmul.bf16.gmra.mxu0 %v393
        %v443 = vpop.f32.mrf.mxu0
        %v444 = vadd.f32 %v269, %v443
        %v445 = vpop.f32.mrf.mxu0
        %446 = vdwg.mxu0
        %447 = vmatpush.bf16.msra.mxu0 0
        %448 = vmatpush.bf16.msra.mxu0 0
        %449 = vmatpush.bf16.msra.mxu0 0
        %450 = vmatpush.bf16.msra.mxu0 0
        %451 = vmatpush.bf16.msra.mxu0 0
        %452 = vmatpush.bf16.msra.mxu0 %v363
        %453 = vmatpush.bf16.msra.mxu0 %v355
        %454 = vmatpush.bf16.msra.mxu0 %v347
        %455 = vmatmul.bf16.gmra.mxu0 %v393
        %v456 = vpop.f32.mrf.mxu0
        %v457 = vadd.f32 %v269, %v456
        %v458 = vpop.f32.mrf.mxu0
        %459 = vdwg.mxu0
        %460 = vmatpush.bf16.msra.mxu0 0
        %461 = vmatpush.bf16.msra.mxu0 0
        %462 = vmatpush.bf16.msra.mxu0 0
        %463 = vmatpush.bf16.msra.mxu0 0
        %464 = vmatpush.bf16.msra.mxu0 0
        %465 = vmatpush.bf16.msra.mxu0 %v364
        %466 = vmatpush.bf16.msra.mxu0 %v356
        %467 = vmatpush.bf16.msra.mxu0 %v348
        %468 = vmatmul.bf16.gmra.mxu0 %v393
        %v469 = vpop.f32.mrf.mxu0
        %v470 = vadd.f32 %v269, %v469
        %v471 = vpop.f32.mrf.mxu0
        %472 = vdwg.mxu0
        %473 = vmatpush.bf16.msra.mxu0 0
        %474 = vmatpush.bf16.msra.mxu0 0
        %475 = vmatpush.bf16.msra.mxu0 0
        %476 = vmatpush.bf16.msra.mxu0 0
        %477 = vmatpush.bf16.msra.mxu0 0
        %478 = vmatpush.bf16.msra.mxu0 %v365
        %479 = vmatpush.bf16.msra.mxu0 %v357
        %480 = vmatpush.bf16.msra.mxu0 %v349
        %481 = vmatmul.bf16.gmra.mxu0 %v393
        %v482 = vpop.f32.mrf.mxu0
        %v483 = vadd.f32 %v269, %v482
        %v484 = vpop.f32.mrf.mxu0
        %485 = vdwg.mxu0
        %486 = vmatpush.bf16.msra.mxu0 0
        %487 = vmatpush.bf16.msra.mxu0 0
        %488 = vmatpush.bf16.msra.mxu0 0
        %489 = vmatpush.bf16.msra.mxu0 0
        %490 = vmatpush.bf16.msra.mxu0 0
        %491 = vmatpush.bf16.msra.mxu0 %v366
        %492 = vmatpush.bf16.msra.mxu0 %v358
        %493 = vmatpush.bf16.msra.mxu0 %v350
        %494 = vmatmul.bf16.gmra.mxu0 %v393
        %v495 = vpop.f32.mrf.mxu0
        %v496 = vadd.f32 %v269, %v495
        %v497 = vpop.f32.mrf.mxu0
        %498 = vdwg.mxu0
        %vm499 = vcmp.ge.f32.partialorder %v405, 0.0
        %vm500 = vcmp.ge.f32.partialorder %v418, 0.0
        %vm501 = vcmp.ge.f32.partialorder %v431, 0.0
        %vm502 = vcmp.ge.f32.partialorder %v444, 0.0
        %vm503 = vcmp.ge.f32.partialorder %v457, 0.0
        %vm504 = vcmp.ge.f32.partialorder %v470, 0.0
        %vm505 = vcmp.ge.f32.partialorder %v483, 0.0
        %vm506 = vcmp.ge.f32.partialorder %v496, 0.0
        %v507 = vmul.f32 %v405, 0.2
        %v508 = vmul.f32 %v418, 0.2
        %v509 = vmul.f32 %v431, 0.2
        %v510 = vmul.f32 %v444, 0.2
        %v511 = vmul.f32 %v457, 0.2
        %v512 = vmul.f32 %v470, 0.2
        %v513 = vmul.f32 %v483, 0.2
        %v514 = vmul.f32 %v496, 0.2
        %v515 = vsel %vm499, %v405, %v507
        %v516 = vsel %vm500, %v418, %v508
        %v517 = vsel %vm501, %v431, %v509
        %v518 = vsel %vm502, %v444, %v510
        %v519 = vsel %vm503, %v457, %v511
        %v520 = vsel %vm504, %v470, %v512
        %v521 = vsel %vm505, %v483, %v513
        %v522 = vsel %vm506, %v496, %v514
        %v523 = vpack.c.bf16 %v516, %v515
        %v524 = vpack.c.bf16 %v518, %v517
        %v525 = vpack.c.bf16 %v520, %v519
        %v526 = vpack.c.bf16 %v522, %v521
        %527 = vst [vmem:[%s237] sm:$0xff] %v523
        %528 = vst [vmem:[%s237 + $0x8] sm:$0xff] %v524
        %529 = vst [vmem:[%s237 + $0x10] sm:$0xff] %v525
        %530 = vst [vmem:[%s237 + $0x18] sm:$0xff] %v526
        %s531 = smul.u32 8, %s14
        %p532 = scmp.lt.s32.totalorder %s531, 15
        %s533 = scalar_select %p532, %s531, 15
        %s534 = smul.addr %s533, 4
        %s535 = scalar_lea.vmem %s3, %s534
        // Predicated region
        $region56: #{discriminator_forward.4} parent=50 // pred_check
          %p536 = pneg %p100
        $region57: #{discriminator_forward.4} parent=50 // pred_check_branch
          %538 = sbr.rel (%p536) target = $region59
        $region58: #{discriminator_forward.4} parent=50 // pred_region
          %s539 = smul.u32 8, %s14
        $region59: #{discriminator_forward.4} parent=50 // pred_fallthru
          _
      $region51: #{discriminator_forward.4} parent=5 // pred_fallthru
        _
      %p540 = scmp.le.s32.totalorder 2, %s9
      // Predicated region
      $region60: #{discriminator_forward.4} parent=5 // pred_check
        %p541 = pneg %p540
      $region61: #{discriminator_forward.4} parent=5 // pred_check_branch
        %543 = sbr.rel (%p541) target = $region63
      $region62: #{discriminator_forward.4} parent=5 // pred_region
        %s544 = ssub.s32 %s9, 2
        // Predicated region
        $region64: #{discriminator_forward.4} parent=62 // pred_check
          %p545 = pneg %p106
        $region65: #{discriminator_forward.4} parent=62 // pred_check_branch
          %547 = sbr.rel (%p545) target = $region67
        $region66: #{discriminator_forward.4} parent=62 // pred_region
          %s548 = smul.u32 8, %s15
          %p549 = scmp.lt.s32.totalorder %s548, 15
          %s550 = scalar_select %p549, %s548, 15
          %s551 = smul.addr %s550, 4
          %s552 = scalar_lea.vmem %s3, %s551
        $region67: #{discriminator_forward.4} parent=62 // pred_fallthru
          _
      $region63: #{discriminator_forward.4} parent=5 // pred_fallthru
        _
    $region6: #{discriminator_forward.4} parent=1 // loop_footer
      %s13 = sadd.s32 1, %s9
    $region7: #{discriminator_forward.4} parent=1 // loop_footer_branch
      %8 = sbr.rel target = $region3
    $region8: #{discriminator_forward.4} parent=1 // loop_exit
      _

// kernel: discriminator_forward.5
$region0: #{discriminator_forward.5}
  #allocation0 [shape = 'u32[]', space=smem, size = 0x4, offset = 0x4, fixed_abs, tag = 'smem constant byte address 0x4 - core index']
  #allocation1 [shape = 'u32[72,128]{1,0:T(1,128)}', space=vmem, size = 0x9000, scoped, tag = 'internal scratch']
  %s0 = inlined_call_operand.vmem [shape: bf16[16,128], index: 0, kind: input, shape index: {}]
  %s1 = inlined_call_operand.vmem [shape: bf16[128,512], index: 1, kind: input, shape index: {}]
  %s2 = inlined_call_operand.vmem [shape: bf16[16,512], index: 2, kind: output, shape index: {0}]
  %s3 = inlined_call_operand.vmem [shape: f32[2,16,128], index: 3, kind: output, shape index: {1}]
  %4 = xla_tuple %s2, %s3
  %s5 = sld [smem:[#allocation0]]
  $region121: #{discriminator_forward.5} parent=0
    _
  %s7 = ssub.s32 1, %s5
  %s8 = scalar_select 0, %s7, %s5
  $region1: #{discriminator_forward.5} parent=0
    #allocation2 [shape = 'u8[131072]{0}', space=vmem, size = 0x20000, scoped, tag = 'input window, operand 1']
    #allocation3 [shape = 'u8[16384]{0}', space=vmem, size = 0x4000, scoped, tag = 'output window, operand 0']
    loop: start=0, step=1, limit=4
    $region2: #{discriminator_forward.5} parent=1 // loop_pre_header
      _
    $region3: #{discriminator_forward.5} parent=1 // loop_header
      %s10 = sphi 0, %s14
      %p11 = scmp.ge.s32.totalorder %s10, 4
      %s18 = sphi 0, %s18
      %s20 = sphi 0, %s18
      %s21 = sphi 0, %s20
      %s35 = sphi 0, %s21
      %s41 = sphi 0, %s43
      %s44 = sphi 0, %s41
      %s45 = sphi 0, %s44
      %s61 = sphi 0, %s45
      %s67 = sphi 0, %s69
      %s70 = sphi 0, %s67
      %s71 = sphi 0, %s70
      %s87 = sphi 0, %s71
      %s93 = sphi 0, %s95
      %s96 = sphi 0, %s93
      %s97 = sphi 0, %s96
      %s113 = sphi 0, %s97
    $region4: #{discriminator_forward.5} parent=1 // loop_header_branch
      %13 = sbr.rel (%p11) target = $region8
    $region5: #{discriminator_forward.5} parent=1 // loop_body
      %s15 = ssub.s32 %s10, 1
      %s16 = ssub.s32 %s10, 2
      %s17 = sadd.s32 %s10, 1
      %s19 = sadd.s32 %s18, 1
      %p22 = scmp.eq.s32.totalorder %s10, 1
      %p23 = scmp.ne.s32.totalorder %s18, %s20
      %p24 = scmp.eq.s32.totalorder %s10, 0
      %p25 = por %p23, %p24
      %p26 = scmp.ne.s32.totalorder %s18, %s20
      %p27 = scmp.eq.s32.totalorder %s15, 1
      %p28 = por %p26, %p27
      %p29 = scmp.ne.s32.totalorder %s20, %s21
      %p30 = scmp.eq.s32.totalorder %s15, 0
      %p31 = por %p29, %p30
      %p32 = scmp.ne.s32.totalorder %s20, %s21
      %p33 = scmp.eq.s32.totalorder %s16, 1
      %p34 = por %p32, %p33
      %p36 = scmp.ne.s32.totalorder %s21, %s35
      %p37 = scmp.eq.s32.totalorder %s16, 0
      %p38 = por %p36, %p37
      %s39 = ssub.s32 %s10, %s17
      %p40 = scmp.eq.s32.totalorder %s39, 0
      %s42 = sadd.s32 %s41, 1
      %s43 = scalar_select %p40, %s41, %s42
      %p46 = pneg %p40
      %p47 = scmp.eq.s32.totalorder %s10, 1
      %p48 = por %p46, %p47
      %p49 = scmp.ne.s32.totalorder %s41, %s44
      %p50 = scmp.eq.s32.totalorder %s10, 0
      %p51 = por %p49, %p50
      %p52 = scmp.ne.s32.totalorder %s41, %s44
      %p53 = scmp.eq.s32.totalorder %s15, 1
      %p54 = por %p52, %p53
      %p55 = scmp.ne.s32.totalorder %s44, %s45
      %p56 = scmp.eq.s32.totalorder %s15, 0
      %p57 = por %p55, %p56
      %p58 = scmp.ne.s32.totalorder %s44, %s45
      %p59 = scmp.eq.s32.totalorder %s16, 1
      %p60 = por %p58, %p59
      %p62 = scmp.ne.s32.totalorder %s45, %s61
      %p63 = scmp.eq.s32.totalorder %s16, 0
      %p64 = por %p62, %p63
      %s65 = ssub.s32 %s10, %s17
      %p66 = scmp.eq.s32.totalorder %s65, 0
      %s68 = sadd.s32 %s67, 1
      %s69 = scalar_select %p66, %s67, %s68
      %p72 = pneg %p66
      %p73 = scmp.eq.s32.totalorder %s10, 1
      %p74 = por %p72, %p73
      %p75 = scmp.ne.s32.totalorder %s67, %s70
      %p76 = scmp.eq.s32.totalorder %s10, 0
      %p77 = por %p75, %p76
      %p78 = scmp.ne.s32.totalorder %s67, %s70
      %p79 = scmp.eq.s32.totalorder %s15, 1
      %p80 = por %p78, %p79
      %p81 = scmp.ne.s32.totalorder %s70, %s71
      %p82 = scmp.eq.s32.totalorder %s15, 0
      %p83 = por %p81, %p82
      %p84 = scmp.ne.s32.totalorder %s70, %s71
      %p85 = scmp.eq.s32.totalorder %s16, 1
      %p86 = por %p84, %p85
      %p88 = scmp.ne.s32.totalorder %s71, %s87
      %p89 = scmp.eq.s32.totalorder %s16, 0
      %p90 = por %p88, %p89
      %s91 = ssub.s32 %s10, %s17
      %p92 = scmp.eq.s32.totalorder %s91, 0
      %s94 = sadd.s32 %s93, 1
      %s95 = scalar_select %p92, %s93, %s94
      %p98 = pneg %p92
      %p99 = scmp.eq.s32.totalorder %s10, 1
      %p100 = por %p98, %p99
      %p101 = scmp.ne.s32.totalorder %s93, %s96
      %p102 = scmp.eq.s32.totalorder %s10, 0
      %p103 = por %p101, %p102
      %p104 = scmp.ne.s32.totalorder %s93, %s96
      %p105 = scmp.eq.s32.totalorder %s15, 1
      %p106 = por %p104, %p105
      %p107 = scmp.ne.s32.totalorder %s96, %s97
      %p108 = scmp.eq.s32.totalorder %s15, 0
      %p109 = por %p107, %p108
      %p110 = scmp.ne.s32.totalorder %s96, %s97
      %p111 = scmp.eq.s32.totalorder %s16, 1
      %p112 = por %p110, %p111
      %p114 = scmp.ne.s32.totalorder %s97, %s113
      %p115 = scmp.eq.s32.totalorder %s16, 0
      %p116 = por %p114, %p115
      %p117 = scmp.le.s32.totalorder 1, %s10
      %p118 = scmp.lt.s32.totalorder %s10, 3
      %p119 = pnand %p117, %p118
      %p120 = pneg %p119
      // Predicated region
      $region9: #{discriminator_forward.5} parent=5 // pred_check
        _
      $region10: #{discriminator_forward.5} parent=5 // pred_check_branch
        %122 = sbr.rel (%p119) target = $region12
      $region11: #{discriminator_forward.5} parent=5 // pred_region
        %s123 = ssub.s32 %s10, 1
        // Predicated region
        $region13: #{discriminator_forward.5} parent=11 // pred_check
          %p124 = pneg %p31
        $region14: #{discriminator_forward.5} parent=11 // pred_check_branch
          %126 = sbr.rel (%p124) target = $region16
        $region15: #{discriminator_forward.5} parent=11 // pred_region
          _
        $region16: #{discriminator_forward.5} parent=11 // pred_fallthru
          _
      $region12: #{discriminator_forward.5} parent=5 // pred_fallthru
        _
      %p127 = scmp.lt.s32.totalorder %s10, 2
      // Predicated region
      $region17: #{discriminator_forward.5} parent=5 // pred_check
        %p128 = pneg %p127
      $region18: #{discriminator_forward.5} parent=5 // pred_check_branch
        %130 = sbr.rel (%p128) target = $region20
      $region19: #{discriminator_forward.5} parent=5 // pred_region
        // Predicated region
        $region21: #{discriminator_forward.5} parent=19 // pred_check
          %p131 = pneg %p51
        $region22: #{discriminator_forward.5} parent=19 // pred_check_branch
          %133 = sbr.rel (%p131) target = $region24
        $region23: #{discriminator_forward.5} parent=19 // pred_region
          %s134 = sand.u32 %s41, 1
          %s135 = sand.u32 %s41, 1
          %s136 = smul.addr %s135, 128
          %s137 = scalar_lea.vmem [#allocation2], %s136
          %s138 = smul.u32 2, %s10
          %s139 = smul.addr %s138, 4
          %s140 = scalar_lea.vmem %s1, %s139
          // Predicated region
          $region25: #{discriminator_forward.5} parent=23 // pred_check
            _
          $region26: #{discriminator_forward.5} parent=23 // pred_check_branch
            %142 = sbr.rel (0) target = $region28
          $region27: #{discriminator_forward.5} parent=23 // pred_region
            // Predicated region
            $region29: #{discriminator_forward.5} parent=27 // pred_check
              _
            $region30: #{discriminator_forward.5} parent=27 // pred_check_branch
              %144 = sbr.rel (0) target = $region32
            $region31: #{discriminator_forward.5} parent=27 // pred_region
              // Predicated region
              $region44: #{discriminator_forward.5} parent=31 // pred_check
                _
              $region45: #{discriminator_forward.5} parent=31 // pred_check_branch
                %190 = sbr.rel (0) target = $region47
              $region46: #{discriminator_forward.5} parent=31 // pred_region
                loop: start=0, step=1, limit=1
                $region48: #{discriminator_forward.5} parent=46 // loop_pre_header
                  _
                $region49: #{discriminator_forward.5} parent=46 // loop_header
                  %s192 = sphi 0, %s196
                  %p193 = scmp.ge.s32.totalorder %s192, 1
                  %s197 = sphi %s140, %s140
                  %s198 = sphi %s137, %s137
                $region50: #{discriminator_forward.5} parent=46 // loop_header_branch
                  %195 = sbr.rel (%p193) target = $region54
                $region51: #{discriminator_forward.5} parent=46 // loop_body
                  %v199 = vld [vmem:[%s197] sm:$0xff]
                  %200 = vst [vmem:[%s198] sm:$0xff] %v199
                  %v201 = vld [vmem:[%s197 + $0x10] sm:$0xff]
                  %202 = vst [vmem:[%s198 + $0x8] sm:$0xff] %v201
                  %v203 = vld [vmem:[%s197 + $0x20] sm:$0xff]
                  %204 = vst [vmem:[%s198 + $0x10] sm:$0xff] %v203
                  %v205 = vld [vmem:[%s197 + $0x30] sm:$0xff]
                  %206 = vst [vmem:[%s198 + $0x18] sm:$0xff] %v205
                  %v207 = vld [vmem:[%s197 + $0x40] sm:$0xff]
                  %208 = vst [vmem:[%s198 + $0x20] sm:$0xff] %v207
                  %v209 = vld [vmem:[%s197 + $0x50] sm:$0xff]
                  %210 = vst [vmem:[%s198 + $0x28] sm:$0xff] %v209
                  %v211 = vld [vmem:[%s197 + $0x60] sm:$0xff]
                  %212 = vst [vmem:[%s198 + $0x30] sm:$0xff] %v211
                  %v213 = vld [vmem:[%s197 + $0x70] sm:$0xff]
                  %214 = vst [vmem:[%s198 + $0x38] sm:$0xff] %v213
                  %v215 = vld [vmem:[%s197 + $0x80] sm:$0xff]
                  %216 = vst [vmem:[%s198 + $0x40] sm:$0xff] %v215
                  %v217 = vld [vmem:[%s197 + $0x90] sm:$0xff]
                  %218 = vst [vmem:[%s198 + $0x48] sm:$0xff] %v217
                  %v219 = vld [vmem:[%s197 + $0xa0] sm:$0xff]
                  %220 = vst [vmem:[%s198 + $0x50] sm:$0xff] %v219
                  %v221 = vld [vmem:[%s197 + $0xb0] sm:$0xff]
                  %222 = vst [vmem:[%s198 + $0x58] sm:$0xff] %v221
                  %v223 = vld [vmem:[%s197 + $0xc0] sm:$0xff]
                  %224 = vst [vmem:[%s198 + $0x60] sm:$0xff] %v223
                  %v225 = vld [vmem:[%s197 + $0xd0] sm:$0xff]
                  %226 = vst [vmem:[%s198 + $0x68] sm:$0xff] %v225
                  %v227 = vld [vmem:[%s197 + $0xe0] sm:$0xff]
                  %228 = vst [vmem:[%s198 + $0x70] sm:$0xff] %v227
                  %v229 = vld [vmem:[%s197 + $0xf0] sm:$0xff]
                  %230 = vst [vmem:[%s198 + $0x78] sm:$0xff] %v229
                $region52: #{discriminator_forward.5} parent=46 // loop_footer
                  %s196 = sadd.s32 1, %s192
                $region53: #{discriminator_forward.5} parent=46 // loop_footer_branch
                  %191 = sbr.rel target = $region49
                $region54: #{discriminator_forward.5} parent=46 // loop_exit
                  _
              $region47: #{discriminator_forward.5} parent=31 // pred_fallthru
                _
              // Predicated region
              $region55: #{discriminator_forward.5} parent=31 // pred_check
                _
              $region56: #{discriminator_forward.5} parent=31 // pred_check_branch
                %232 = sbr.rel target = $region58
              $region57: #{discriminator_forward.5} parent=31 // pred_region
                _
              $region58: #{discriminator_forward.5} parent=31 // pred_fallthru
                _
            $region32: #{discriminator_forward.5} parent=27 // pred_fallthru
              _
            // Predicated region
            $region33: #{discriminator_forward.5} parent=27 // pred_check
              _
            $region34: #{discriminator_forward.5} parent=27 // pred_check_branch
              %146 = sbr.rel target = $region36
            $region35: #{discriminator_forward.5} parent=27 // pred_region
              %s148 = ssub.s32 256, 1
              loop: start=0, step=1, limit=1
              $region37: #{discriminator_forward.5} parent=35 // loop_pre_header
                _
              $region38: #{discriminator_forward.5} parent=35 // loop_header
                %s150 = sphi 0, %s154
                %p151 = scmp.ge.s32.totalorder %s150, 1
                %s155 = sphi %s140, %s140
                %s156 = sphi %s137, %s137
              $region39: #{discriminator_forward.5} parent=35 // loop_header_branch
                %153 = sbr.rel (%p151) target = $region43
              $region40: #{discriminator_forward.5} parent=35 // loop_body
                %v157 = vld [vmem:[%s155] sm:%s148]
                %158 = vst [vmem:[%s156] sm:%s148] %v157
                %v159 = vld [vmem:[%s155 + $0x10] sm:%s148]
                %160 = vst [vmem:[%s156 + $0x8] sm:%s148] %v159
                %v161 = vld [vmem:[%s155 + $0x20] sm:%s148]
                %162 = vst [vmem:[%s156 + $0x10] sm:%s148] %v161
                %v163 = vld [vmem:[%s155 + $0x30] sm:%s148]
                %164 = vst [vmem:[%s156 + $0x18] sm:%s148] %v163
                %v165 = vld [vmem:[%s155 + $0x40] sm:%s148]
                %166 = vst [vmem:[%s156 + $0x20] sm:%s148] %v165
                %v167 = vld [vmem:[%s155 + $0x50] sm:%s148]
                %168 = vst [vmem:[%s156 + $0x28] sm:%s148] %v167
                %v169 = vld [vmem:[%s155 + $0x60] sm:%s148]
                %170 = vst [vmem:[%s156 + $0x30] sm:%s148] %v169
                %v171 = vld [vmem:[%s155 + $0x70] sm:%s148]
                %172 = vst [vmem:[%s156 + $0x38] sm:%s148] %v171
                %v173 = vld [vmem:[%s155 + $0x80] sm:%s148]
                %174 = vst [vmem:[%s156 + $0x40] sm:%s148] %v173
                %v175 = vld [vmem:[%s155 + $0x90] sm:%s148]
                %176 = vst [vmem:[%s156 + $0x48] sm:%s148] %v175
                %v177 = vld [vmem:[%s155 + $0xa0] sm:%s148]
                %178 = vst [vmem:[%s156 + $0x50] sm:%s148] %v177
                %v179 = vld [vmem:[%s155 + $0xb0] sm:%s148]
                %180 = vst [vmem:[%s156 + $0x58] sm:%s148] %v179
                %v181 = vld [vmem:[%s155 + $0xc0] sm:%s148]
                %182 = vst [vmem:[%s156 + $0x60] sm:%s148] %v181
                %v183 = vld [vmem:[%s155 + $0xd0] sm:%s148]
                %184 = vst [vmem:[%s156 + $0x68] sm:%s148] %v183
                %v185 = vld [vmem:[%s155 + $0xe0] sm:%s148]
                %186 = vst [vmem:[%s156 + $0x70] sm:%s148] %v185
                %v187 = vld [vmem:[%s155 + $0xf0] sm:%s148]
                %188 = vst [vmem:[%s156 + $0x78] sm:%s148] %v187
              $region41: #{discriminator_forward.5} parent=35 // loop_footer
                %s154 = sadd.s32 1, %s150
              $region42: #{discriminator_forward.5} parent=35 // loop_footer_branch
                %149 = sbr.rel target = $region38
              $region43: #{discriminator_forward.5} parent=35 // loop_exit
                _
            $region36: #{discriminator_forward.5} parent=27 // pred_fallthru
              _
          $region28: #{discriminator_forward.5} parent=23 // pred_fallthru
            _
          %233 = vnop
        $region24: #{discriminator_forward.5} parent=19 // pred_fallthru
          _
      $region20: #{discriminator_forward.5} parent=5 // pred_fallthru
        _
      %p234 = scmp.le.s32.totalorder 1, %s10
      %p235 = scmp.lt.s32.totalorder %s10, 3
      %p236 = pnand %p234, %p235
      %p237 = pneg %p236
      // Predicated region
      $region59: #{discriminator_forward.5} parent=5 // pred_check
        _
      $region60: #{discriminator_forward.5} parent=5 // pred_check_branch
        %239 = sbr.rel (%p236) target = $region62
      $region61: #{discriminator_forward.5} parent=5 // pred_region
        %s240 = ssub.s32 %s10, 1
        %s241 = sand.u32 %s44, 1
        %s242 = sand.u32 %s44, 1
        %s243 = smul.addr %s242, 128
        %s244 = scalar_lea.vmem [#allocation2], %s243
        // Predicated region
        $region63: #{discriminator_forward.5} parent=61 // pred_check
          %p245 = pneg %p57
        $region64: #{discriminator_forward.5} parent=61 // pred_check_branch
          %247 = sbr.rel (%p245) target = $region66
        $region65: #{discriminator_forward.5} parent=61 // pred_region
          _
        $region66: #{discriminator_forward.5} parent=61 // pred_fallthru
          _
        %p248 = pneg %p31
        %p249 = pneg %p28
        %s250 = sand.u32 %s44, 1
        %s251 = sand.u32 %s44, 1
        %s252 = smul.addr %s251, 128
        %s253 = scalar_lea.vmem [#allocation2], %s252
        %p254 = pneg %p57
        %p255 = pneg %p54
        %p256 = pneg %p83
        %p257 = pneg %p80
        %s258 = sand.u32 %s70, 1
        %s259 = sand.u32 %s70, 1
        %s260 = smul.addr %s259, 16
        %s261 = scalar_lea.vmem [#allocation3], %s260
        %p262 = pneg %p109
        %p263 = pneg %p106
        %p264 = scmp.lt.s32.totalorder %s15, 1
        %s265 = scalar_select %p264, %s15, 1
        %s266 = smul.addr %s265, 2
        %s267 = smul.addr %s266, 8
        %s268 = scalar_lea.vmem %s3, %s267
        %s269 = smul.u32 2, %s15
        %s270 = smul.u32 2, %s15
        %p271 = scmp.lt.s32.totalorder %s15, 1
        %s272 = scalar_select %p271, %s15, 1
        %s273 = smul.addr %s272, 2
        %s274 = smul.addr %s273, 8
        %s275 = scalar_lea.vmem %s3, %s274
        %v276 = vld [vmem:[%s0] sm:$0xf]
        %v277 = vld [vmem:[%s0 + $0x4] sm:$0xf]
        %v278 = vld [vmem:[%s244] sm:$0xff]
        %v279 = vld [vmem:[%s244 + $0x8] sm:$0xff]
        %v280 = vld [vmem:[%s244 + $0x10] sm:$0xff]
        %v281 = vld [vmem:[%s244 + $0x18] sm:$0xff]
        %v282 = vld [vmem:[%s244 + $0x20] sm:$0xff]
        %v283 = vld [vmem:[%s244 + $0x28] sm:$0xff]
        %v284 = vld [vmem:[%s244 + $0x30] sm:$0xff]
        %v285 = vld [vmem:[%s244 + $0x38] sm:$0xff]
        %v286 = vld [vmem:[%s244 + $0x40] sm:$0xff]
        %v287 = vld [vmem:[%s244 + $0x48] sm:$0xff]
        %v288 = vld [vmem:[%s244 + $0x50] sm:$0xff]
        %v289 = vld [vmem:[%s244 + $0x58] sm:$0xff]
        %v290 = vld [vmem:[%s244 + $0x60] sm:$0xff]
        %v291 = vld [vmem:[%s244 + $0x68] sm:$0xff]
        %v292 = vld [vmem:[%s244 + $0x70] sm:$0xff]
        %v293 = vld [vmem:[%s244 + $0x78] sm:$0xff]
        %v296 = vunpack.c.l.b16 %v276
        %v297 = vunpack.c.l.b16 %v277
        %v298 = vpack.c.b16 %v297, %v296
        %v316 = vunpack.c.l.b16 %v278
        %v317 = vunpack.c.h.b16 %v278
        %v318 = vunpack.c.l.b16 %v279
        %v319 = vunpack.c.h.b16 %v279
        %v320 = vunpack.c.l.b16 %v280
        %v321 = vunpack.c.h.b16 %v280
        %v322 = vunpack.c.l.b16 %v281
        %v323 = vunpack.c.h.b16 %v281
        %v324 = vunpack.c.l.b16 %v282
        %v325 = vunpack.c.h.b16 %v282
        %v326 = vunpack.c.l.b16 %v283
        %v327 = vunpack.c.h.b16 %v283
        %v328 = vunpack.c.l.b16 %v284
        %v329 = vunpack.c.h.b16 %v284
        %v330 = vunpack.c.l.b16 %v285
        %v331 = vunpack.c.h.b16 %v285
        %v332 = vunpack.c.l.b16 %v286
        %v333 = vunpack.c.h.b16 %v286
        %v334 = vunpack.c.l.b16 %v287
        %v335 = vunpack.c.h.b16 %v287
        %v336 = vunpack.c.l.b16 %v288
        %v337 = vunpack.c.h.b16 %v288
        %v338 = vunpack.c.l.b16 %v289
        %v339 = vunpack.c.h.b16 %v289
        %v340 = vunpack.c.l.b16 %v290
        %v341 = vunpack.c.h.b16 %v290
        %v342 = vunpack.c.l.b16 %v291
        %v343 = vunpack.c.h.b16 %v291
        %v344 = vunpack.c.l.b16 %v292
        %v345 = vunpack.c.h.b16 %v292
        %v346 = vunpack.c.l.b16 %v293
        %v347 = vunpack.c.h.b16 %v293
        %v348 = vpack.c.b16 %v318, %v316
        %v349 = vpack.c.b16 %v319, %v317
        %v350 = vpack.c.b16 %v322, %v320
        %v351 = vpack.c.b16 %v323, %v321
        %v352 = vpack.c.b16 %v326, %v324
        %v353 = vpack.c.b16 %v327, %v325
        %v354 = vpack.c.b16 %v330, %v328
        %v355 = vpack.c.b16 %v331, %v329
        %v356 = vpack.c.b16 %v334, %v332
        %v357 = vpack.c.b16 %v335, %v333
        %v358 = vpack.c.b16 %v338, %v336
        %v359 = vpack.c.b16 %v339, %v337
        %v360 = vpack.c.b16 %v342, %v340
        %v361 = vpack.c.b16 %v343, %v341
        %v362 = vpack.c.b16 %v346, %v344
        %v363 = vpack.c.b16 %v347, %v345
        %380 = vmatpush.bf16.msra.mxu0 %v362
        %381 = vmatpush.bf16.msra.mxu0 %v360
        %382 = vmatpush.bf16.msra.mxu0 %v358
        %383 = vmatpush.bf16.msra.mxu0 %v356
        %384 = vmatpush.bf16.msra.mxu0 %v354
        %385 = vmatpush.bf16.msra.mxu0 %v352
        %386 = vmatpush.bf16.msra.mxu0 %v350
        %387 = vmatpush.bf16.msra.mxu0 %v348
        %388 = vmatmul.bf16.gmra.mxu0 %v298
        %v389 = vpop.f32.mrf.mxu0
        %v390 = vadd.f32 0.0, %v389
        %v391 = vpop.f32.mrf.mxu0
        %v392 = vadd.f32 0.0, %v391
        %393 = vdwg.mxu0
        %394 = vmatpush.bf16.msra.mxu0 %v363
        %395 = vmatpush.bf16.msra.mxu0 %v361
        %396 = vmatpush.bf16.msra.mxu0 %v359
        %397 = vmatpush.bf16.msra.mxu0 %v357
        %398 = vmatpush.bf16.msra.mxu0 %v355
        %399 = vmatpush.bf16.msra.mxu0 %v353
        %400 = vmatpush.bf16.msra.mxu0 %v351
        %401 = vmatpush.bf16.msra.mxu0 %v349
        %402 = vmatmul.bf16.gmra.mxu0 %v298
        %v403 = vpop.f32.mrf.mxu0
        %v404 = vadd.f32 0.0, %v403
        %v405 = vpop.f32.mrf.mxu0
        %v406 = vadd.f32 0.0, %v405
        %407 = vdwg.mxu0
        %v408 = vpack.c.bf16 %v404, %v390
        %v409 = vpack.c.bf16 %v406, %v392
        %410 = vst [vmem:[%s261] sm:$0xff] %v408
        %411 = vst [vmem:[%s261 + $0x8] sm:$0xff] %v409
        %v412 = vadd.f32 %v390, %v404
        %413 = vadd.xlane.f32.xlu0 %v412
        %v414 = vpop.xlane.xlu0 %413
        %v415 = vadd.f32 %v392, %v406
        %416 = vadd.xlane.f32.xlu0 %v415
        %v417 = vpop.xlane.xlu0 %416
        %v418 = vmul.f32 %v390, %v390
        %v419 = vmul.f32 %v404, %v404
        %v420 = vmul.f32 %v392, %v392
        %v421 = vmul.f32 %v406, %v406
        %v422 = vadd.f32 %v418, %v419
        %423 = vadd.xlane.f32.xlu0 %v422
        %v424 = vpop.xlane.xlu0 %423
        %v425 = vadd.f32 %v420, %v421
        %426 = vadd.xlane.f32.xlu0 %v425
        %v427 = vpop.xlane.xlu0 %426
        %v428 = vlaneseq
        %v429 = vand.u32 %v428, 127
        %vm430 = vcmp.eq.s32.totalorder %v429, 0
        %v431 = vsel %vm430, %v414, 0.0
        %v432 = vsel %vm430, %v417, 0.0
        %vm433 = vcmp.eq.s32.totalorder %v429, 1
        %v434 = vsel %vm433, %v424, 0.0
        %v435 = vsel %vm433, %v427, 0.0
        %v436 = vadd.f32 %v431, %v434
        %v437 = vadd.f32 %v432, %v435
        %438 = vst [vmem:[%s275] sm:$0xff] %v436
        %439 = vst [vmem:[%s275 + $0x8] sm:$0xff] %v437
        %s440 = sand.u32 %s70, 1
        %s441 = sand.u32 %s70, 1
        %s442 = smul.addr %s441, 16
        %s443 = scalar_lea.vmem [#allocation3], %s442
        %p444 = scmp.lt.s32.totalorder %s15, 1
        %s445 = scalar_select %p444, %s15, 1
        %s446 = smul.addr %s445, 2
        %s447 = smul.addr %s446, 8
        %s448 = scalar_lea.vmem %s3, %s447
        // Predicated region
        $region67: #{discriminator_forward.5} parent=61 // pred_check
          %p449 = pneg %p80
        $region68: #{discriminator_forward.5} parent=61 // pred_check_branch
          %451 = sbr.rel (%p449) target = $region70
        $region69: #{discriminator_forward.5} parent=61 // pred_region
          %s452 = smul.u32 2, %s15
          %s453 = smul.addr %s452, 4
          %s454 = scalar_lea.vmem %s2, %s453
          // Predicated region
          $region71: #{discriminator_forward.5} parent=69 // pred_check
            _
          $region72: #{discriminator_forward.5} parent=69 // pred_check_branch
            %456 = sbr.rel (0) target = $region74
          $region73: #{discriminator_forward.5} parent=69 // pred_region
            // Predicated region
            $region75: #{discriminator_forward.5} parent=73 // pred_check
              _
            $region76: #{discriminator_forward.5} parent=73 // pred_check_branch
              %458 = sbr.rel (0) target = $region78
            $region77: #{discriminator_forward.5} parent=73 // pred_region
              // Predicated region
              $region90: #{discriminator_forward.5} parent=77 // pred_check
                _
              $region91: #{discriminator_forward.5} parent=77 // pred_check_branch
                %476 = sbr.rel (0) target = $region93
              $region92: #{discriminator_forward.5} parent=77 // pred_region
                loop: start=0, step=1, limit=1
                $region94: #{discriminator_forward.5} parent=92 // loop_pre_header
                  _
                $region95: #{discriminator_forward.5} parent=92 // loop_header
                  %s478 = sphi 0, %s482
                  %p479 = scmp.ge.s32.totalorder %s478, 1
                  %s483 = sphi %s443, %s443
                  %s484 = sphi %s454, %s454
                $region96: #{discriminator_forward.5} parent=92 // loop_header_branch
                  %481 = sbr.rel (%p479) target = $region100
                $region97: #{discriminator_forward.5} parent=92 // loop_body
                  %v485 = vld [vmem:[%s483] sm:$0xff]
                  %486 = vst [vmem:[%s484] sm:$0xff] %v485
                  %v487 = vld [vmem:[%s483 + $0x8] sm:$0xff]
                  %488 = vst [vmem:[%s484 + $0x10] sm:$0xff] %v487
                $region98: #{discriminator_forward.5} parent=92 // loop_footer
                  %s482 = sadd.s32 1, %s478
                $region99: #{discriminator_forward.5} parent=92 // loop_footer_branch
                  %477 = sbr.rel target = $region95
                $region100: #{discriminator_forward.5} parent=92 // loop_exit
                  _
              $region93: #{discriminator_forward.5} parent=77 // pred_fallthru
                _
              // Predicated region
              $region101: #{discriminator_forward.5} parent=77 // pred_check
                _
              $region102: #{discriminator_forward.5} parent=77 // pred_check_branch
                %490 = sbr.rel target = $region104
              $region103: #{discriminator_forward.5} parent=77 // pred_region
                _
              $region104: #{discriminator_forward.5} parent=77 // pred_fallthru
                _
            $region78: #{discriminator_forward.5} parent=73 // pred_fallthru
              _
            // Predicated region
            $region79: #{discriminator_forward.5} parent=73 // pred_check
              _
            $region80: #{discriminator_forward.5} parent=73 // pred_check_branch
              %460 = sbr.rel target = $region82
            $region81: #{discriminator_forward.5} parent=73 // pred_region
              %s462 = ssub.s32 256, 1
              loop: start=0, step=1, limit=1
              $region83: #{discriminator_forward.5} parent=81 // loop_pre_header
                _
              $region84: #{discriminator_forward.5} parent=81 // loop_header
                %s464 = sphi 0, %s468
                %p465 = scmp.ge.s32.totalorder %s464, 1
                %s469 = sphi %s443, %s443
                %s470 = sphi %s454, %s454
              $region85: #{discriminator_forward.5} parent=81 // loop_header_branch
                %467 = sbr.rel (%p465) target = $region89
              $region86: #{discriminator_forward.5} parent=81 // loop_body
                %v471 = vld [vmem:[%s469] sm:%s462]
                %472 = vst [vmem:[%s470] sm:%s462] %v471
                %v473 = vld [vmem:[%s469 + $0x8] sm:%s462]
                %474 = vst [vmem:[%s470 + $0x10] sm:%s462] %v473
              $region87: #{discriminator_forward.5} parent=81 // loop_footer
                %s468 = sadd.s32 1, %s464
              $region88: #{discriminator_forward.5} parent=81 // loop_footer_branch
                %463 = sbr.rel target = $region84
              $region89: #{discriminator_forward.5} parent=81 // loop_exit
                _
            $region82: #{discriminator_forward.5} parent=73 // pred_fallthru
              _
          $region74: #{discriminator_forward.5} parent=69 // pred_fallthru
            _
          %491 = vnop
        $region70: #{discriminator_forward.5} parent=61 // pred_fallthru
          _
        // Predicated region
        $region105: #{discriminator_forward.5} parent=61 // pred_check
          %p492 = pneg %p106
        $region106: #{discriminator_forward.5} parent=61 // pred_check_branch
          %494 = sbr.rel (%p492) target = $region108
        $region107: #{discriminator_forward.5} parent=61 // pred_region
          _
        $region108: #{discriminator_forward.5} parent=61 // pred_fallthru
          _
      $region62: #{discriminator_forward.5} parent=5 // pred_fallthru
        _
      %p495 = scmp.le.s32.totalorder 2, %s10
      // Predicated region
      $region109: #{discriminator_forward.5} parent=5 // pred_check
        %p496 = pneg %p495
      $region110: #{discriminator_forward.5} parent=5 // pred_check_branch
        %498 = sbr.rel (%p496) target = $region112
      $region111: #{discriminator_forward.5} parent=5 // pred_region
        %s499 = ssub.s32 %s10, 2
        // Predicated region
        $region113: #{discriminator_forward.5} parent=111 // pred_check
          %p500 = pneg %p86
        $region114: #{discriminator_forward.5} parent=111 // pred_check_branch
          %502 = sbr.rel (%p500) target = $region116
        $region115: #{discriminator_forward.5} parent=111 // pred_region
          %s503 = sand.u32 %s71, 1
          %s504 = sand.u32 %s71, 1
          %s505 = smul.addr %s504, 16
          %s506 = scalar_lea.vmem [#allocation3], %s505
        $region116: #{discriminator_forward.5} parent=111 // pred_fallthru
          _
        // Predicated region
        $region117: #{discriminator_forward.5} parent=111 // pred_check
          %p507 = pneg %p112
        $region118: #{discriminator_forward.5} parent=111 // pred_check_branch
          %509 = sbr.rel (%p507) target = $region120
        $region119: #{discriminator_forward.5} parent=111 // pred_region
          %p510 = scmp.lt.s32.totalorder %s16, 1
          %s511 = scalar_select %p510, %s16, 1
          %s512 = smul.addr %s511, 2
          %s513 = smul.addr %s512, 8
          %s514 = scalar_lea.vmem %s3, %s513
        $region120: #{discriminator_forward.5} parent=111 // pred_fallthru
          _
      $region112: #{discriminator_forward.5} parent=5 // pred_fallthru
        _
    $region6: #{discriminator_forward.5} parent=1 // loop_footer
      %s14 = sadd.s32 1, %s10
    $region7: #{discriminator_forward.5} parent=1 // loop_footer_branch
      %9 = sbr.rel target = $region3
    $region8: #{discriminator_forward.5} parent=1 // loop_exit
      _

// kernel: discriminator_forward.6
$region0: #{discriminator_forward.6}
  #allocation0 [shape = 'u32[]', space=smem, size = 0x4, offset = 0x4, fixed_abs, tag = 'smem constant byte address 0x4 - core index']
  #allocation1 [shape = 'u32[72,128]{1,0:T(1,128)}', space=vmem, size = 0x9000, scoped, tag = 'internal scratch']
  %s0 = inlined_call_operand.vmem [shape: bf16[32,256], index: 0, kind: input, shape index: {}]
  %s1 = inlined_call_operand.vmem [shape: bf16[256,128], index: 1, kind: input, shape index: {}]
  %s2 = inlined_call_operand.vmem [shape: bf16[32,128], index: 2, kind: output, shape index: {0}]
  %s3 = inlined_call_operand.vmem [shape: f32[1,32,128], index: 3, kind: output, shape index: {1}]
  %4 = xla_tuple %s2, %s3
  %s5 = sld [smem:[#allocation0]]
  $region26: #{discriminator_forward.6} parent=0
    _
  %s7 = ssub.s32 1, %s5
  %s8 = scalar_select 0, %s7, %s5
  // Predicated region
  $region2: #{discriminator_forward.6} parent=0 // pred_check
    _
  $region3: #{discriminator_forward.6} parent=0 // pred_check_branch
    %10 = sbr.rel (0) target = $region5
  $region4: #{discriminator_forward.6} parent=0 // pred_region
    _
  $region5: #{discriminator_forward.6} parent=0 // pred_fallthru
    _
  // Predicated region
  $region6: #{discriminator_forward.6} parent=0 // pred_check
    _
  $region7: #{discriminator_forward.6} parent=0 // pred_check_branch
    %12 = sbr.rel (0) target = $region9
  $region8: #{discriminator_forward.6} parent=0 // pred_region
    _
  $region9: #{discriminator_forward.6} parent=0 // pred_fallthru
    _
  %v13 = vld [vmem:[%s0] sm:$0xff]
  %v14 = vld [vmem:[%s0 + $0x8] sm:$0xff]
  %v15 = vld [vmem:[%s0 + $0x10] sm:$0xff]
  %v16 = vld [vmem:[%s0 + $0x18] sm:$0xff]
  %v17 = vld [vmem:[%s1] sm:$0xf]
  %v18 = vld [vmem:[%s1 + $0x4] sm:$0xf]
  %v19 = vld [vmem:[%s1 + $0x8] sm:$0xf]
  %v20 = vld [vmem:[%s1 + $0xc] sm:$0xf]
  %v21 = vld [vmem:[%s1 + $0x10] sm:$0xf]
  %v22 = vld [vmem:[%s1 + $0x14] sm:$0xf]
  %v23 = vld [vmem:[%s1 + $0x18] sm:$0xf]
  %v24 = vld [vmem:[%s1 + $0x1c] sm:$0xf]
  %v25 = vld [vmem:[%s1 + $0x20] sm:$0xf]
  %v26 = vld [vmem:[%s1 + $0x24] sm:$0xf]
  %v27 = vld [vmem:[%s1 + $0x28] sm:$0xf]
  %v28 = vld [vmem:[%s1 + $0x2c] sm:$0xf]
  %v29 = vld [vmem:[%s1 + $0x30] sm:$0xf]
  %v30 = vld [vmem:[%s1 + $0x34] sm:$0xf]
  %v31 = vld [vmem:[%s1 + $0x38] sm:$0xf]
  %v32 = vld [vmem:[%s1 + $0x3c] sm:$0xf]
  %v33 = vld [vmem:[%s1 + $0x40] sm:$0xf]
  %v34 = vld [vmem:[%s1 + $0x44] sm:$0xf]
  %v35 = vld [vmem:[%s1 + $0x48] sm:$0xf]
  %v36 = vld [vmem:[%s1 + $0x4c] sm:$0xf]
  %v37 = vld [vmem:[%s1 + $0x50] sm:$0xf]
  %v38 = vld [vmem:[%s1 + $0x54] sm:$0xf]
  %v39 = vld [vmem:[%s1 + $0x58] sm:$0xf]
  %v40 = vld [vmem:[%s1 + $0x5c] sm:$0xf]
  %v41 = vld [vmem:[%s1 + $0x60] sm:$0xf]
  %v42 = vld [vmem:[%s1 + $0x64] sm:$0xf]
  %v43 = vld [vmem:[%s1 + $0x68] sm:$0xf]
  %v44 = vld [vmem:[%s1 + $0x6c] sm:$0xf]
  %v45 = vld [vmem:[%s1 + $0x70] sm:$0xf]
  %v46 = vld [vmem:[%s1 + $0x74] sm:$0xf]
  %v47 = vld [vmem:[%s1 + $0x78] sm:$0xf]
  %v48 = vld [vmem:[%s1 + $0x7c] sm:$0xf]
  %v53 = vunpack.c.l.b16 %v13
  %v54 = vunpack.c.h.b16 %v13
  %v55 = vunpack.c.l.b16 %v14
  %v56 = vunpack.c.h.b16 %v14
  %v57 = vunpack.c.l.b16 %v15
  %v58 = vunpack.c.h.b16 %v15
  %v59 = vunpack.c.l.b16 %v16
  %v60 = vunpack.c.h.b16 %v16
  %v61 = vpack.c.b16 %v55, %v53
  %v62 = vpack.c.b16 %v56, %v54
  %v63 = vpack.c.b16 %v59, %v57
  %v64 = vpack.c.b16 %v60, %v58
  %v101 = vunpack.c.l.b16 %v17
  %v102 = vunpack.c.l.b16 %v18
  %v103 = vunpack.c.l.b16 %v19
  %v104 = vunpack.c.l.b16 %v20
  %v105 = vunpack.c.l.b16 %v21
  %v106 = vunpack.c.l.b16 %v22
  %v107 = vunpack.c.l.b16 %v23
  %v108 = vunpack.c.l.b16 %v24
  %v109 = vunpack.c.l.b16 %v25
  %v110 = vunpack.c.l.b16 %v26
  %v111 = vunpack.c.l.b16 %v27
  %v112 = vunpack.c.l.b16 %v28
  %v113 = vunpack.c.l.b16 %v29
  %v114 = vunpack.c.l.b16 %v30
  %v115 = vunpack.c.l.b16 %v31
  %v116 = vunpack.c.l.b16 %v32
  %v117 = vunpack.c.l.b16 %v33
  %v118 = vunpack.c.l.b16 %v34
  %v119 = vunpack.c.l.b16 %v35
  %v120 = vunpack.c.l.b16 %v36
  %v121 = vunpack.c.l.b16 %v37
  %v122 = vunpack.c.l.b16 %v38
  %v123 = vunpack.c.l.b16 %v39
  %v124 = vunpack.c.l.b16 %v40
  %v125 = vunpack.c.l.b16 %v41
  %v126 = vunpack.c.l.b16 %v42
  %v127 = vunpack.c.l.b16 %v43
  %v128 = vunpack.c.l.b16 %v44
  %v129 = vunpack.c.l.b16 %v45
  %v130 = vunpack.c.l.b16 %v46
  %v131 = vunpack.c.l.b16 %v47
  %v132 = vunpack.c.l.b16 %v48
  %v133 = vpack.c.b16 %v102, %v101
  %v134 = vpack.c.b16 %v104, %v103
  %v135 = vpack.c.b16 %v106, %v105
  %v136 = vpack.c.b16 %v108, %v107
  %v137 = vpack.c.b16 %v110, %v109
  %v138 = vpack.c.b16 %v112, %v111
  %v139 = vpack.c.b16 %v114, %v113
  %v140 = vpack.c.b16 %v116, %v115
  %v141 = vpack.c.b16 %v118, %v117
  %v142 = vpack.c.b16 %v120, %v119
  %v143 = vpack.c.b16 %v122, %v121
  %v144 = vpack.c.b16 %v124, %v123
  %v145 = vpack.c.b16 %v126, %v125
  %v146 = vpack.c.b16 %v128, %v127
  %v147 = vpack.c.b16 %v130, %v129
  %v148 = vpack.c.b16 %v132, %v131
  %165 = vmatpush.bf16.msra.mxu0 %v140
  %166 = vmatpush.bf16.msra.mxu0 %v139
  %167 = vmatpush.bf16.msra.mxu0 %v138
  %168 = vmatpush.bf16.msra.mxu0 %v137
  %169 = vmatpush.bf16.msra.mxu0 %v136
  %170 = vmatpush.bf16.msra.mxu0 %v135
  %171 = vmatpush.bf16.msra.mxu0 %v134
  %172 = vmatpush.bf16.msra.mxu0 %v133
  %173 = vmatmul.bf16.gmra.mxu0 %v61
  %v174 = vpop.f32.mrf.mxu0
  %v175 = vadd.f32 0.0, %v174
  %v176 = vpop.f32.mrf.mxu0
  %v177 = vadd.f32 0.0, %v176
  %178 = vmatmul.bf16.gmra.mxu0 %v63
  %v179 = vpop.f32.mrf.mxu0
  %v180 = vadd.f32 0.0, %v179
  %v181 = vpop.f32.mrf.mxu0
  %v182 = vadd.f32 0.0, %v181
  %183 = vdwg.mxu0
  %184 = vmatpush.bf16.msra.mxu0 %v148
  %185 = vmatpush.bf16.msra.mxu0 %v147
  %186 = vmatpush.bf16.msra.mxu0 %v146
  %187 = vmatpush.bf16.msra.mxu0 %v145
  %188 = vmatpush.bf16.msra.mxu0 %v144
  %189 = vmatpush.bf16.msra.mxu0 %v143
  %190 = vmatpush.bf16.msra.mxu0 %v142
  %191 = vmatpush.bf16.msra.mxu0 %v141
  %192 = vmatmul.bf16.gmra.mxu0 %v62
  %v193 = vpop.f32.mrf.mxu0
  %v194 = vadd.f32 %v175, %v193
  %v195 = vpop.f32.mrf.mxu0
  %v196 = vadd.f32 %v177, %v195
  %197 = vmatmul.bf16.gmra.mxu0 %v64
  %v198 = vpop.f32.mrf.mxu0
  %v199 = vadd.f32 %v180, %v198
  %v200 = vpop.f32.mrf.mxu0
  %v201 = vadd.f32 %v182, %v200
  %202 = vdwg.mxu0
  %v203 = vpack.c.bf16 %v194, %v194
  %v204 = vpack.c.bf16 %v196, %v196
  %v205 = vpack.c.bf16 %v199, %v199
  %v206 = vpack.c.bf16 %v201, %v201
  %207 = vst [vmem:[%s2] sm:$0xf] %v203
  %208 = vst [vmem:[%s2 + $0x4] sm:$0xf] %v204
  %209 = vst [vmem:[%s2 + $0x8] sm:$0xf] %v205
  %210 = vst [vmem:[%s2 + $0xc] sm:$0xf] %v206
  %211 = vadd.xlane.f32.xlu0 %v194
  %v212 = vpop.xlane.xlu0 %211
  %213 = vadd.xlane.f32.xlu0 %v196
  %v214 = vpop.xlane.xlu0 %213
  %215 = vadd.xlane.f32.xlu0 %v199
  %v216 = vpop.xlane.xlu0 %215
  %217 = vadd.xlane.f32.xlu0 %v201
  %v218 = vpop.xlane.xlu0 %217
  %v219 = vmul.f32 %v194, %v194
  %v220 = vmul.f32 %v196, %v196
  %v221 = vmul.f32 %v199, %v199
  %v222 = vmul.f32 %v201, %v201
  %223 = vadd.xlane.f32.xlu0 %v219
  %v224 = vpop.xlane.xlu0 %223
  %225 = vadd.xlane.f32.xlu0 %v220
  %v226 = vpop.xlane.xlu0 %225
  %227 = vadd.xlane.f32.xlu0 %v221
  %v228 = vpop.xlane.xlu0 %227
  %229 = vadd.xlane.f32.xlu0 %v222
  %v230 = vpop.xlane.xlu0 %229
  %v231 = vlaneseq
  %v232 = vand.u32 %v231, 127
  %vm233 = vcmp.eq.s32.totalorder %v232, 0
  %v234 = vsel %vm233, %v212, 0.0
  %v235 = vsel %vm233, %v214, 0.0
  %v236 = vsel %vm233, %v216, 0.0
  %v237 = vsel %vm233, %v218, 0.0
  %vm238 = vcmp.eq.s32.totalorder %v232, 1
  %v239 = vsel %vm238, %v224, 0.0
  %v240 = vsel %vm238, %v226, 0.0
  %v241 = vsel %vm238, %v228, 0.0
  %v242 = vsel %vm238, %v230, 0.0
  %v243 = vadd.f32 %v234, %v239
  %v244 = vadd.f32 %v235, %v240
  %v245 = vadd.f32 %v236, %v241
  %v246 = vadd.f32 %v237, %v242
  %247 = vst [vmem:[%s3] sm:$0xff] %v243
  %248 = vst [vmem:[%s3 + $0x8] sm:$0xff] %v244
  %249 = vst [vmem:[%s3 + $0x10] sm:$0xff] %v245
  %250 = vst [vmem:[%s3 + $0x18] sm:$0xff] %v246
  // Predicated region
  $region10: #{discriminator_forward.6} parent=0 // pred_check
    _
  $region11: #{discriminator_forward.6} parent=0 // pred_check_branch
    %252 = sbr.rel (0) target = $region13
  $region12: #{discriminator_forward.6} parent=0 // pred_region
    _
  $region13: #{discriminator_forward.6} parent=0 // pred_fallthru
    _
  // Predicated region
  $region14: #{discriminator_forward.6} parent=0 // pred_check
    _
  $region15: #{discriminator_forward.6} parent=0 // pred_check_branch
    %254 = sbr.rel (0) target = $region17
  $region16: #{discriminator_forward.6} parent=0 // pred_region
    _
  $region17: #{discriminator_forward.6} parent=0 // pred_fallthru
    _
  // Predicated region
  $region18: #{discriminator_forward.6} parent=0 // pred_check
    _
  $region19: #{discriminator_forward.6} parent=0 // pred_check_branch
    %256 = sbr.rel (0) target = $region21
  $region20: #{discriminator_forward.6} parent=0 // pred_region
    _
  $region21: #{discriminator_forward.6} parent=0 // pred_fallthru
    _
  // Predicated region
  $region22: #{discriminator_forward.6} parent=0 // pred_check
    _
  $region23: #{discriminator_forward.6} parent=0 // pred_check_branch
    %258 = sbr.rel (0) target = $region25
  $region24: #{discriminator_forward.6} parent=0 // pred_region
    _
  $region25: #{discriminator_forward.6} parent=0 // pred_fallthru
    _

// kernel: discriminator_forward.7
$region0: #{discriminator_forward.7}
  #allocation0 [shape = 'u32[]', space=smem, size = 0x4, offset = 0x4, fixed_abs, tag = 'smem constant byte address 0x4 - core index']
  #allocation1 [shape = 'u32[72,128]{1,0:T(1,128)}', space=vmem, size = 0x9000, scoped, tag = 'internal scratch']
  %s0 = inlined_call_operand.vmem [shape: bf16[64,512], index: 0, kind: input, shape index: {}]
  %s1 = inlined_call_operand.vmem [shape: bf16[512,128], index: 1, kind: input, shape index: {}]
  %s2 = inlined_call_operand.vmem [shape: bf16[64,128], index: 2, kind: output, shape index: {0}]
  %s3 = inlined_call_operand.vmem [shape: f32[1,64,128], index: 3, kind: output, shape index: {1}]
  %4 = xla_tuple %s2, %s3
  %s5 = sld [smem:[#allocation0]]
  $region26: #{discriminator_forward.7} parent=0
    _
  %s7 = ssub.s32 1, %s5
  %s8 = scalar_select 0, %s7, %s5
  // Predicated region
  $region2: #{discriminator_forward.7} parent=0 // pred_check
    _
  $region3: #{discriminator_forward.7} parent=0 // pred_check_branch
    %10 = sbr.rel (0) target = $region5
  $region4: #{discriminator_forward.7} parent=0 // pred_region
    _
  $region5: #{discriminator_forward.7} parent=0 // pred_fallthru
    _
  // Predicated region
  $region6: #{discriminator_forward.7} parent=0 // pred_check
    _
  $region7: #{discriminator_forward.7} parent=0 // pred_check_branch
    %12 = sbr.rel (0) target = $region9
  $region8: #{discriminator_forward.7} parent=0 // pred_region
    _
  $region9: #{discriminator_forward.7} parent=0 // pred_fallthru
    _
  %v13 = vld [vmem:[%s0] sm:$0xff]
  %v14 = vld [vmem:[%s0 + $0x8] sm:$0xff]
  %v15 = vld [vmem:[%s0 + $0x10] sm:$0xff]
  %v16 = vld [vmem:[%s0 + $0x18] sm:$0xff]
  %v17 = vld [vmem:[%s0 + $0x20] sm:$0xff]
  %v18 = vld [vmem:[%s0 + $0x28] sm:$0xff]
  %v19 = vld [vmem:[%s0 + $0x30] sm:$0xff]
  %v20 = vld [vmem:[%s0 + $0x38] sm:$0xff]
  %v21 = vld [vmem:[%s0 + $0x40] sm:$0xff]
  %v22 = vld [vmem:[%s0 + $0x48] sm:$0xff]
  %v23 = vld [vmem:[%s0 + $0x50] sm:$0xff]
  %v24 = vld [vmem:[%s0 + $0x58] sm:$0xff]
  %v25 = vld [vmem:[%s0 + $0x60] sm:$0xff]
  %v26 = vld [vmem:[%s0 + $0x68] sm:$0xff]
  %v27 = vld [vmem:[%s0 + $0x70] sm:$0xff]
  %v28 = vld [vmem:[%s0 + $0x78] sm:$0xff]
  %v29 = vld [vmem:[%s1] sm:$0xf]
  %v30 = vld [vmem:[%s1 + $0x4] sm:$0xf]
  %v31 = vld [vmem:[%s1 + $0x8] sm:$0xf]
  %v32 = vld [vmem:[%s1 + $0xc] sm:$0xf]
  %v33 = vld [vmem:[%s1 + $0x10] sm:$0xf]
  %v34 = vld [vmem:[%s1 + $0x14] sm:$0xf]
  %v35 = vld [vmem:[%s1 + $0x18] sm:$0xf]
  %v36 = vld [vmem:[%s1 + $0x1c] sm:$0xf]
  %v37 = vld [vmem:[%s1 + $0x20] sm:$0xf]
  %v38 = vld [vmem:[%s1 + $0x24] sm:$0xf]
  %v39 = vld [vmem:[%s1 + $0x28] sm:$0xf]
  %v40 = vld [vmem:[%s1 + $0x2c] sm:$0xf]
  %v41 = vld [vmem:[%s1 + $0x30] sm:$0xf]
  %v42 = vld [vmem:[%s1 + $0x34] sm:$0xf]
  %v43 = vld [vmem:[%s1 + $0x38] sm:$0xf]
  %v44 = vld [vmem:[%s1 + $0x3c] sm:$0xf]
  %v45 = vld [vmem:[%s1 + $0x40] sm:$0xf]
  %v46 = vld [vmem:[%s1 + $0x44] sm:$0xf]
  %v47 = vld [vmem:[%s1 + $0x48] sm:$0xf]
  %v48 = vld [vmem:[%s1 + $0x4c] sm:$0xf]
  %v49 = vld [vmem:[%s1 + $0x50] sm:$0xf]
  %v50 = vld [vmem:[%s1 + $0x54] sm:$0xf]
  %v51 = vld [vmem:[%s1 + $0x58] sm:$0xf]
  %v52 = vld [vmem:[%s1 + $0x5c] sm:$0xf]
  %v53 = vld [vmem:[%s1 + $0x60] sm:$0xf]
  %v54 = vld [vmem:[%s1 + $0x64] sm:$0xf]
  %v55 = vld [vmem:[%s1 + $0x68] sm:$0xf]
  %v56 = vld [vmem:[%s1 + $0x6c] sm:$0xf]
  %v57 = vld [vmem:[%s1 + $0x70] sm:$0xf]
  %v58 = vld [vmem:[%s1 + $0x74] sm:$0xf]
  %v59 = vld [vmem:[%s1 + $0x78] sm:$0xf]
  %v60 = vld [vmem:[%s1 + $0x7c] sm:$0xf]
  %v61 = vld [vmem:[%s1 + $0x80] sm:$0xf]
  %v62 = vld [vmem:[%s1 + $0x84] sm:$0xf]
  %v63 = vld [vmem:[%s1 + $0x88] sm:$0xf]
  %v64 = vld [vmem:[%s1 + $0x8c] sm:$0xf]
  %v65 = vld [vmem:[%s1 + $0x90] sm:$0xf]
  %v66 = vld [vmem:[%s1 + $0x94] sm:$0xf]
  %v67 = vld [vmem:[%s1 + $0x98] sm:$0xf]
  %v68 = vld [vmem:[%s1 + $0x9c] sm:$0xf]
  %v69 = vld [vmem:[%s1 + $0xa0] sm:$0xf]
  %v70 = vld [vmem:[%s1 + $0xa4] sm:$0xf]
  %v71 = vld [vmem:[%s1 + $0xa8] sm:$0xf]
  %v72 = vld [vmem:[%s1 + $0xac] sm:$0xf]
  %v73 = vld [vmem:[%s1 + $0xb0] sm:$0xf]
  %v74 = vld [vmem:[%s1 + $0xb4] sm:$0xf]
  %v75 = vld [vmem:[%s1 + $0xb8] sm:$0xf]
  %v76 = vld [vmem:[%s1 + $0xbc] sm:$0xf]
  %v77 = vld [vmem:[%s1 + $0xc0] sm:$0xf]
  %v78 = vld [vmem:[%s1 + $0xc4] sm:$0xf]
  %v79 = vld [vmem:[%s1 + $0xc8] sm:$0xf]
  %v80 = vld [vmem:[%s1 + $0xcc] sm:$0xf]
  %v81 = vld [vmem:[%s1 + $0xd0] sm:$0xf]
  %v82 = vld [vmem:[%s1 + $0xd4] sm:$0xf]
  %v83 = vld [vmem:[%s1 + $0xd8] sm:$0xf]
  %v84 = vld [vmem:[%s1 + $0xdc] sm:$0xf]
  %v85 = vld [vmem:[%s1 + $0xe0] sm:$0xf]
  %v86 = vld [vmem:[%s1 + $0xe4] sm:$0xf]
  %v87 = vld [vmem:[%s1 + $0xe8] sm:$0xf]
  %v88 = vld [vmem:[%s1 + $0xec] sm:$0xf]
  %v89 = vld [vmem:[%s1 + $0xf0] sm:$0xf]
  %v90 = vld [vmem:[%s1 + $0xf4] sm:$0xf]
  %v91 = vld [vmem:[%s1 + $0xf8] sm:$0xf]
  %v92 = vld [vmem:[%s1 + $0xfc] sm:$0xf]
  %v109 = vunpack.c.l.b16 %v13
  %v110 = vunpack.c.h.b16 %v13
  %v111 = vunpack.c.l.b16 %v14
  %v112 = vunpack.c.h.b16 %v14
  %v113 = vunpack.c.l.b16 %v15
  %v114 = vunpack.c.h.b16 %v15
  %v115 = vunpack.c.l.b16 %v16
  %v116 = vunpack.c.h.b16 %v16
  %v117 = vunpack.c.l.b16 %v17
  %v118 = vunpack.c.h.b16 %v17
  %v119 = vunpack.c.l.b16 %v18
  %v120 = vunpack.c.h.b16 %v18
  %v121 = vunpack.c.l.b16 %v19
  %v122 = vunpack.c.h.b16 %v19
  %v123 = vunpack.c.l.b16 %v20
  %v124 = vunpack.c.h.b16 %v20
  %v125 = vunpack.c.l.b16 %v21
  %v126 = vunpack.c.h.b16 %v21
  %v127 = vunpack.c.l.b16 %v22
  %v128 = vunpack.c.h.b16 %v22
  %v129 = vunpack.c.l.b16 %v23
  %v130 = vunpack.c.h.b16 %v23
  %v131 = vunpack.c.l.b16 %v24
  %v132 = vunpack.c.h.b16 %v24
  %v133 = vunpack.c.l.b16 %v25
  %v134 = vunpack.c.h.b16 %v25
  %v135 = vunpack.c.l.b16 %v26
  %v136 = vunpack.c.h.b16 %v26
  %v137 = vunpack.c.l.b16 %v27
  %v138 = vunpack.c.h.b16 %v27
  %v139 = vunpack.c.l.b16 %v28
  %v140 = vunpack.c.h.b16 %v28
  %v141 = vpack.c.b16 %v113, %v109
  %v142 = vpack.c.b16 %v114, %v110
  %v143 = vpack.c.b16 %v115, %v111
  %v144 = vpack.c.b16 %v116, %v112
  %v145 = vpack.c.b16 %v121, %v117
  %v146 = vpack.c.b16 %v122, %v118
  %v147 = vpack.c.b16 %v123, %v119
  %v148 = vpack.c.b16 %v124, %v120
  %v149 = vpack.c.b16 %v129, %v125
  %v150 = vpack.c.b16 %v130, %v126
  %v151 = vpack.c.b16 %v131, %v127
  %v152 = vpack.c.b16 %v132, %v128
  %v153 = vpack.c.b16 %v137, %v133
  %v154 = vpack.c.b16 %v138, %v134
  %v155 = vpack.c.b16 %v139, %v135
  %v156 = vpack.c.b16 %v140, %v136
  %v237 = vunpack.c.l.b16 %v29
  %v238 = vunpack.c.l.b16 %v30
  %v239 = vunpack.c.l.b16 %v31
  %v240 = vunpack.c.l.b16 %v32
  %v241 = vunpack.c.l.b16 %v33
  %v242 = vunpack.c.l.b16 %v34
  %v243 = vunpack.c.l.b16 %v35
  %v244 = vunpack.c.l.b16 %v36
  %v245 = vunpack.c.l.b16 %v37
  %v246 = vunpack.c.l.b16 %v38
  %v247 = vunpack.c.l.b16 %v39
  %v248 = vunpack.c.l.b16 %v40
  %v249 = vunpack.c.l.b16 %v41
  %v250 = vunpack.c.l.b16 %v42
  %v251 = vunpack.c.l.b16 %v43
  %v252 = vunpack.c.l.b16 %v44
  %v253 = vunpack.c.l.b16 %v45
  %v254 = vunpack.c.l.b16 %v46
  %v255 = vunpack.c.l.b16 %v47
  %v256 = vunpack.c.l.b16 %v48
  %v257 = vunpack.c.l.b16 %v49
  %v258 = vunpack.c.l.b16 %v50
  %v259 = vunpack.c.l.b16 %v51
  %v260 = vunpack.c.l.b16 %v52
  %v261 = vunpack.c.l.b16 %v53
  %v262 = vunpack.c.l.b16 %v54
  %v263 = vunpack.c.l.b16 %v55
  %v264 = vunpack.c.l.b16 %v56
  %v265 = vunpack.c.l.b16 %v57
  %v266 = vunpack.c.l.b16 %v58
  %v267 = vunpack.c.l.b16 %v59
  %v268 = vunpack.c.l.b16 %v60
  %v269 = vunpack.c.l.b16 %v61
  %v270 = vunpack.c.l.b16 %v62
  %v271 = vunpack.c.l.b16 %v63
  %v272 = vunpack.c.l.b16 %v64
  %v273 = vunpack.c.l.b16 %v65
  %v274 = vunpack.c.l.b16 %v66
  %v275 = vunpack.c.l.b16 %v67
  %v276 = vunpack.c.l.b16 %v68
  %v277 = vunpack.c.l.b16 %v69
  %v278 = vunpack.c.l.b16 %v70
  %v279 = vunpack.c.l.b16 %v71
  %v280 = vunpack.c.l.b16 %v72
  %v281 = vunpack.c.l.b16 %v73
  %v282 = vunpack.c.l.b16 %v74
  %v283 = vunpack.c.l.b16 %v75
  %v284 = vunpack.c.l.b16 %v76
  %v285 = vunpack.c.l.b16 %v77
  %v286 = vunpack.c.l.b16 %v78
  %v287 = vunpack.c.l.b16 %v79
  %v288 = vunpack.c.l.b16 %v80
  %v289 = vunpack.c.l.b16 %v81
  %v290 = vunpack.c.l.b16 %v82
  %v291 = vunpack.c.l.b16 %v83
  %v292 = vunpack.c.l.b16 %v84
  %v293 = vunpack.c.l.b16 %v85
  %v294 = vunpack.c.l.b16 %v86
  %v295 = vunpack.c.l.b16 %v87
  %v296 = vunpack.c.l.b16 %v88
  %v297 = vunpack.c.l.b16 %v89
  %v298 = vunpack.c.l.b16 %v90
  %v299 = vunpack.c.l.b16 %v91
  %v300 = vunpack.c.l.b16 %v92
  %v301 = vpack.c.b16 %v238, %v237
  %v302 = vpack.c.b16 %v240, %v239
  %v303 = vpack.c.b16 %v242, %v241
  %v304 = vpack.c.b16 %v244, %v243
  %v305 = vpack.c.b16 %v246, %v245
  %v306 = vpack.c.b16 %v248, %v247
  %v307 = vpack.c.b16 %v250, %v249
  %v308 = vpack.c.b16 %v252, %v251
  %v309 = vpack.c.b16 %v254, %v253
  %v310 = vpack.c.b16 %v256, %v255
  %v311 = vpack.c.b16 %v258, %v257
  %v312 = vpack.c.b16 %v260, %v259
  %v313 = vpack.c.b16 %v262, %v261
  %v314 = vpack.c.b16 %v264, %v263
  %v315 = vpack.c.b16 %v266, %v265
  %v316 = vpack.c.b16 %v268, %v267
  %v317 = vpack.c.b16 %v270, %v269
  %v318 = vpack.c.b16 %v272, %v271
  %v319 = vpack.c.b16 %v274, %v273
  %v320 = vpack.c.b16 %v276, %v275
  %v321 = vpack.c.b16 %v278, %v277
  %v322 = vpack.c.b16 %v280, %v279
  %v323 = vpack.c.b16 %v282, %v281
  %v324 = vpack.c.b16 %v284, %v283
  %v325 = vpack.c.b16 %v286, %v285
  %v326 = vpack.c.b16 %v288, %v287
  %v327 = vpack.c.b16 %v290, %v289
  %v328 = vpack.c.b16 %v292, %v291
  %v329 = vpack.c.b16 %v294, %v293
  %v330 = vpack.c.b16 %v296, %v295
  %v331 = vpack.c.b16 %v298, %v297
  %v332 = vpack.c.b16 %v300, %v299
  %365 = vmatpush.bf16.msra.mxu0 %v308
  %366 = vmatpush.bf16.msra.mxu0 %v307
  %367 = vmatpush.bf16.msra.mxu0 %v306
  %368 = vmatpush.bf16.msra.mxu0 %v305
  %369 = vmatpush.bf16.msra.mxu0 %v304
  %370 = vmatpush.bf16.msra.mxu0 %v303
  %371 = vmatpush.bf16.msra.mxu0 %v302
  %372 = vmatpush.bf16.msra.mxu0 %v301
  %373 = vmatmul.bf16.gmra.mxu0 %v141
  %v374 = vpop.f32.mrf.mxu0
  %v375 = vadd.f32 0.0, %v374
  %v376 = vpop.f32.mrf.mxu0
  %v377 = vadd.f32 0.0, %v376
  %378 = vmatmul.bf16.gmra.mxu0 %v145
  %v379 = vpop.f32.mrf.mxu0
  %v380 = vadd.f32 0.0, %v379
  %v381 = vpop.f32.mrf.mxu0
  %v382 = vadd.f32 0.0, %v381
  %383 = vmatmul.bf16.gmra.mxu0 %v149
  %v384 = vpop.f32.mrf.mxu0
  %v385 = vadd.f32 0.0, %v384
  %v386 = vpop.f32.mrf.mxu0
  %v387 = vadd.f32 0.0, %v386
  %388 = vmatmul.bf16.gmra.mxu0 %v153
  %v389 = vpop.f32.mrf.mxu0
  %v390 = vadd.f32 0.0, %v389
  %v391 = vpop.f32.mrf.mxu0
  %v392 = vadd.f32 0.0, %v391
  %393 = vdwg.mxu0
  %394 = vmatpush.bf16.msra.mxu0 %v316
  %395 = vmatpush.bf16.msra.mxu0 %v315
  %396 = vmatpush.bf16.msra.mxu0 %v314
  %397 = vmatpush.bf16.msra.mxu0 %v313
  %398 = vmatpush.bf16.msra.mxu0 %v312
  %399 = vmatpush.bf16.msra.mxu0 %v311
  %400 = vmatpush.bf16.msra.mxu0 %v310
  %401 = vmatpush.bf16.msra.mxu0 %v309
  %402 = vmatmul.bf16.gmra.mxu0 %v142
  %v403 = vpop.f32.mrf.mxu0
  %v404 = vadd.f32 %v375, %v403
  %v405 = vpop.f32.mrf.mxu0
  %v406 = vadd.f32 %v377, %v405
  %407 = vmatmul.bf16.gmra.mxu0 %v146
  %v408 = vpop.f32.mrf.mxu0
  %v409 = vadd.f32 %v380, %v408
  %v410 = vpop.f32.mrf.mxu0
  %v411 = vadd.f32 %v382, %v410
  %412 = vmatmul.bf16.gmra.mxu0 %v150
  %v413 = vpop.f32.mrf.mxu0
  %v414 = vadd.f32 %v385, %v413
  %v415 = vpop.f32.mrf.mxu0
  %v416 = vadd.f32 %v387, %v415
  %417 = vmatmul.bf16.gmra.mxu0 %v154
  %v418 = vpop.f32.mrf.mxu0
  %v419 = vadd.f32 %v390, %v418
  %v420 = vpop.f32.mrf.mxu0
  %v421 = vadd.f32 %v392, %v420
  %422 = vdwg.mxu0
  %423 = vmatpush.bf16.msra.mxu0 %v324
  %424 = vmatpush.bf16.msra.mxu0 %v323
  %425 = vmatpush.bf16.msra.mxu0 %v322
  %426 = vmatpush.bf16.msra.mxu0 %v321
  %427 = vmatpush.bf16.msra.mxu0 %v320
  %428 = vmatpush.bf16.msra.mxu0 %v319
  %429 = vmatpush.bf16.msra.mxu0 %v318
  %430 = vmatpush.bf16.msra.mxu0 %v317
  %431 = vmatmul.bf16.gmra.mxu0 %v143
  %v432 = vpop.f32.mrf.mxu0
  %v433 = vadd.f32 %v404, %v432
  %v434 = vpop.f32.mrf.mxu0
  %v435 = vadd.f32 %v406, %v434
  %436 = vmatmul.bf16.gmra.mxu0 %v147
  %v437 = vpop.f32.mrf.mxu0
  %v438 = vadd.f32 %v409, %v437
  %v439 = vpop.f32.mrf.mxu0
  %v440 = vadd.f32 %v411, %v439
  %441 = vmatmul.bf16.gmra.mxu0 %v151
  %v442 = vpop.f32.mrf.mxu0
  %v443 = vadd.f32 %v414, %v442
  %v444 = vpop.f32.mrf.mxu0
  %v445 = vadd.f32 %v416, %v444
  %446 = vmatmul.bf16.gmra.mxu0 %v155
  %v447 = vpop.f32.mrf.mxu0
  %v448 = vadd.f32 %v419, %v447
  %v449 = vpop.f32.mrf.mxu0
  %v450 = vadd.f32 %v421, %v449
  %451 = vdwg.mxu0
  %452 = vmatpush.bf16.msra.mxu0 %v332
  %453 = vmatpush.bf16.msra.mxu0 %v331
  %454 = vmatpush.bf16.msra.mxu0 %v330
  %455 = vmatpush.bf16.msra.mxu0 %v329
  %456 = vmatpush.bf16.msra.mxu0 %v328
  %457 = vmatpush.bf16.msra.mxu0 %v327
  %458 = vmatpush.bf16.msra.mxu0 %v326
  %459 = vmatpush.bf16.msra.mxu0 %v325
  %460 = vmatmul.bf16.gmra.mxu0 %v144
  %v461 = vpop.f32.mrf.mxu0
  %v462 = vadd.f32 %v433, %v461
  %v463 = vpop.f32.mrf.mxu0
  %v464 = vadd.f32 %v435, %v463
  %465 = vmatmul.bf16.gmra.mxu0 %v148
  %v466 = vpop.f32.mrf.mxu0
  %v467 = vadd.f32 %v438, %v466
  %v468 = vpop.f32.mrf.mxu0
  %v469 = vadd.f32 %v440, %v468
  %470 = vmatmul.bf16.gmra.mxu0 %v152
  %v471 = vpop.f32.mrf.mxu0
  %v472 = vadd.f32 %v443, %v471
  %v473 = vpop.f32.mrf.mxu0
  %v474 = vadd.f32 %v445, %v473
  %475 = vmatmul.bf16.gmra.mxu0 %v156
  %v476 = vpop.f32.mrf.mxu0
  %v477 = vadd.f32 %v448, %v476
  %v478 = vpop.f32.mrf.mxu0
  %v479 = vadd.f32 %v450, %v478
  %480 = vdwg.mxu0
  %v481 = vpack.c.bf16 %v462, %v462
  %v482 = vpack.c.bf16 %v464, %v464
  %v483 = vpack.c.bf16 %v467, %v467
  %v484 = vpack.c.bf16 %v469, %v469
  %v485 = vpack.c.bf16 %v472, %v472
  %v486 = vpack.c.bf16 %v474, %v474
  %v487 = vpack.c.bf16 %v477, %v477
  %v488 = vpack.c.bf16 %v479, %v479
  %489 = vst [vmem:[%s2] sm:$0xf] %v481
  %490 = vst [vmem:[%s2 + $0x4] sm:$0xf] %v482
  %491 = vst [vmem:[%s2 + $0x8] sm:$0xf] %v483
  %492 = vst [vmem:[%s2 + $0xc] sm:$0xf] %v484
  %493 = vst [vmem:[%s2 + $0x10] sm:$0xf] %v485
  %494 = vst [vmem:[%s2 + $0x14] sm:$0xf] %v486
  %495 = vst [vmem:[%s2 + $0x18] sm:$0xf] %v487
  %496 = vst [vmem:[%s2 + $0x1c] sm:$0xf] %v488
  %497 = vadd.xlane.f32.xlu0 %v462
  %v498 = vpop.xlane.xlu0 %497
  %499 = vadd.xlane.f32.xlu0 %v464
  %v500 = vpop.xlane.xlu0 %499
  %501 = vadd.xlane.f32.xlu0 %v467
  %v502 = vpop.xlane.xlu0 %501
  %503 = vadd.xlane.f32.xlu0 %v469
  %v504 = vpop.xlane.xlu0 %503
  %505 = vadd.xlane.f32.xlu0 %v472
  %v506 = vpop.xlane.xlu0 %505
  %507 = vadd.xlane.f32.xlu0 %v474
  %v508 = vpop.xlane.xlu0 %507
  %509 = vadd.xlane.f32.xlu0 %v477
  %v510 = vpop.xlane.xlu0 %509
  %511 = vadd.xlane.f32.xlu0 %v479
  %v512 = vpop.xlane.xlu0 %511
  %v513 = vmul.f32 %v462, %v462
  %v514 = vmul.f32 %v464, %v464
  %v515 = vmul.f32 %v467, %v467
  %v516 = vmul.f32 %v469, %v469
  %v517 = vmul.f32 %v472, %v472
  %v518 = vmul.f32 %v474, %v474
  %v519 = vmul.f32 %v477, %v477
  %v520 = vmul.f32 %v479, %v479
  %521 = vadd.xlane.f32.xlu0 %v513
  %v522 = vpop.xlane.xlu0 %521
  %523 = vadd.xlane.f32.xlu0 %v514
  %v524 = vpop.xlane.xlu0 %523
  %525 = vadd.xlane.f32.xlu0 %v515
  %v526 = vpop.xlane.xlu0 %525
  %527 = vadd.xlane.f32.xlu0 %v516
  %v528 = vpop.xlane.xlu0 %527
  %529 = vadd.xlane.f32.xlu0 %v517
  %v530 = vpop.xlane.xlu0 %529
  %531 = vadd.xlane.f32.xlu0 %v518
  %v532 = vpop.xlane.xlu0 %531
  %533 = vadd.xlane.f32.xlu0 %v519
  %v534 = vpop.xlane.xlu0 %533
  %535 = vadd.xlane.f32.xlu0 %v520
  %v536 = vpop.xlane.xlu0 %535
  %v537 = vlaneseq
  %v538 = vand.u32 %v537, 127
  %vm539 = vcmp.eq.s32.totalorder %v538, 0
  %v540 = vsel %vm539, %v498, 0.0
  %v541 = vsel %vm539, %v500, 0.0
  %v542 = vsel %vm539, %v502, 0.0
  %v543 = vsel %vm539, %v504, 0.0
  %v544 = vsel %vm539, %v506, 0.0
  %v545 = vsel %vm539, %v508, 0.0
  %v546 = vsel %vm539, %v510, 0.0
  %v547 = vsel %vm539, %v512, 0.0
  %vm548 = vcmp.eq.s32.totalorder %v538, 1
  %v549 = vsel %vm548, %v522, 0.0
  %v550 = vsel %vm548, %v524, 0.0
  %v551 = vsel %vm548, %v526, 0.0
  %v552 = vsel %vm548, %v528, 0.0
  %v553 = vsel %vm548, %v530, 0.0
  %v554 = vsel %vm548, %v532, 0.0
  %v555 = vsel %vm548, %v534, 0.0
  %v556 = vsel %vm548, %v536, 0.0
  %v557 = vadd.f32 %v540, %v549
  %v558 = vadd.f32 %v541, %v550
  %v559 = vadd.f32 %v542, %v551
  %v560 = vadd.f32 %v543, %v552
  %v561 = vadd.f32 %v544, %v553
  %v562 = vadd.f32 %v545, %v554
  %v563 = vadd.f32 %v546, %v555
  %v564 = vadd.f32 %v547, %v556
  %565 = vst [vmem:[%s3] sm:$0xff] %v557
  %566 = vst [vmem:[%s3 + $0x8] sm:$0xff] %v558
  %567 = vst [vmem:[%s3 + $0x10] sm:$0xff] %v559
  %568 = vst [vmem:[%s3 + $0x18] sm:$0xff] %v560
  %569 = vst [vmem:[%s3 + $0x20] sm:$0xff] %v561
  %570 = vst [vmem:[%s3 + $0x28] sm:$0xff] %v562
  %571 = vst [vmem:[%s3 + $0x30] sm:$0xff] %v563
  %572 = vst [vmem:[%s3 + $0x38] sm:$0xff] %v564
  // Predicated region
  $region10: #{discriminator_forward.7} parent=0 // pred_check
    _
  $region11: #{discriminator_forward.7} parent=0 // pred_check_branch
    %574 = sbr.rel (0) target = $region13
  $region12: #{discriminator_forward.7} parent=0 // pred_region
    _
  $region13: #{discriminator_forward.7} parent=0 // pred_fallthru
    _
  // Predicated region
  $region14: #{discriminator_forward.7} parent=0 // pred_check
    _
  $region15: #{discriminator_forward.7} parent=0 // pred_check_branch
    %576 = sbr.rel (0) target = $region17
  $region16: #{discriminator_forward.7} parent=0 // pred_region
    _
  $region17: #{discriminator_forward.7} parent=0 // pred_fallthru
    _
  // Predicated region
  $region18: #{discriminator_forward.7} parent=0 // pred_check
    _
  $region19: #{discriminator_forward.7} parent=0 // pred_check_branch
    %578 = sbr.rel (0) target = $region21
  $region20: #{discriminator_forward.7} parent=0 // pred_region
    _
  $region21: #{discriminator_forward.7} parent=0 // pred_fallthru
    _
  // Predicated region
  $region22: #{discriminator_forward.7} parent=0 // pred_check
    _
  $region23: #{discriminator_forward.7} parent=0 // pred_check_branch
    %580 = sbr.rel (0) target = $region25
  $region24: #{discriminator_forward.7} parent=0 // pred_region
    _
  $region25: #{discriminator_forward.7} parent=0 // pred_fallthru
    _

</llo_original>
